<compile_context>
chip_gen: v5e
topology: v5e:2x2
jax: 0.10.0
libtpu: 0.0.40
codegen_flags: <defaults>
</compile_context>

<pallas_src>
import jax
import jax.numpy as jnp
from jax import lax
from jax.experimental import pallas as pl
from jax.experimental.pallas import tpu as pltpu

# ----------------------- small synthetic RoBERTa config -----------------------
VOCAB = 120
MAX_POS = 64            # must be >= SEQ + PAD_ID + 1
TYPE_VOCAB = 1
HIDDEN = 128            # lane-dense (== 128-lane vreg width)
NUM_HEADS = 4
HEAD_DIM = HIDDEN // NUM_HEADS
INTERMEDIATE = 256
NUM_LAYERS = 2
LN_EPS = 1e-5
PAD_ID = 1              # RoBERTa pad token id


# ------------------------------ shared helpers --------------------------------
def _layernorm(x, gamma, beta):
    mu = jnp.mean(x, axis=-1, keepdims=True)
    var = jnp.mean((x - mu) ** 2, axis=-1, keepdims=True)
    return (x - mu) * jax.lax.rsqrt(var + LN_EPS) * gamma + beta


def _gelu(x):
    # TODO(synk): HF RoBERTa uses exact erf-GELU; tanh approximation used here.
    c = 0.7978845608028654  # sqrt(2/pi)
    return 0.5 * x * (1.0 + jnp.tanh(c * (x + 0.044715 * x * x * x)))


# --------------------------- fused forward kernel -----------------------------
def fused_roberta_kernel(h0_ref,                      # (1,S,H) f32  embedding-LN output (this batch elem)
                         bias_ref,                    # (1,1,S) f32  additive attention bias
                         wqkv_ref, bqkv_ref,          # (L,H,3H) bf16, (L,1,3H) f32
                         wao_ref, vec_ref,            # (L,H,H) bf16, (L,6,H) f32  [bao,g1,be1,bfo,g2,be2]
                         wi_ref, bi_ref, wfo_ref,     # (L,H,I) bf16, (L,1,I) f32, (L,I,H) bf16
                         out_ref):                    # (1,S,H) f32
    _, S, H = h0_ref.shape
    L = wqkv_ref.shape[0]
    NH = NUM_HEADS
    HD = H // NH

    bias = bias_ref[...]                 # (1,1,S) f32 -> broadcasts over (NH,S,S)
    h = h0_ref[...].reshape(S, H)        # f32 residual stream

    for l in range(L):                   # static unroll over layers
        x_bf = h.astype(jnp.bfloat16)

        # ---------- fused QKV projection: one lane-dense (S,H)x(H,3H) dot ------
        qkv = jnp.dot(x_bf, wqkv_ref[l],
                      preferred_element_type=jnp.float32) + bqkv_ref[l, 0]
        q = qkv[:, 0 * H:1 * H].astype(jnp.bfloat16)     # (S,H), heads contiguous along lanes
        k = qkv[:, 1 * H:2 * H].astype(jnp.bfloat16)
        v = qkv[:, 2 * H:3 * H].astype(jnp.bfloat16)

        # ---------- per-head QK^T (MXU), head-batched softmax (one of each op) --
        # 1/sqrt(HD) already folded into Wq/bq at pack time.
        s = jnp.stack(
            [lax.dot_general(q[:, hi * HD:(hi + 1) * HD],
                             k[:, hi * HD:(hi + 1) * HD],
                             (((1,), (1,)), ((), ())),
                             preferred_element_type=jnp.float32)
             for hi in range(NH)], axis=0)                      # (NH,S,S) f32
        s = s + bias
        s = s - jnp.max(s, axis=-1, keepdims=True)
        p = jnp.exp(s)
        p = p * pl.reciprocal(jnp.sum(p, axis=-1, keepdims=True), approx=True)
        p = p.astype(jnp.bfloat16)

        # ---------- per-head PV, lane-concat, ONE output projection dot --------
        ctx = jnp.concatenate(
            [jnp.dot(p[hi], v[:, hi * HD:(hi + 1) * HD],
                     preferred_element_type=jnp.float32)
             for hi in range(NH)], axis=-1).astype(jnp.bfloat16)  # (S,H)
        attn = jnp.dot(ctx, wao_ref[l],
                       preferred_element_type=jnp.float32) + vec_ref[l, 0]
        h1 = _layernorm(h + attn, vec_ref[l, 1], vec_ref[l, 2])

        # ------------------------------- FFN -----------------------------------
        inter = _gelu(jnp.dot(h1.astype(jnp.bfloat16), wi_ref[l],
                              preferred_element_type=jnp.float32) + bi_ref[l, 0])
        ffn = jnp.dot(inter.astype(jnp.bfloat16), wfo_ref[l],
                      preferred_element_type=jnp.float32) + vec_ref[l, 3]
        h = _layernorm(h1 + ffn, vec_ref[l, 4], vec_ref[l, 5])

    out_ref[...] = h.reshape(1, S, H)


# ------------------------------ pallas wrapper ---------------------------------
def fused_forward(h0, bias, packed):
    B, S, H = h0.shape
    I = INTERMEDIATE
    L = NUM_LAYERS

    in_specs = [
        pl.BlockSpec((1, S, H), lambda b: (b, 0, 0)),        # h0 (per batch element)
        pl.BlockSpec((1, 1, S), lambda b: (b, 0, 0)),        # attention bias
        pl.BlockSpec((L, H, 3 * H), lambda b: (0, 0, 0)),    # Wqkv   (all layers, fetched once)
        pl.BlockSpec((L, 1, 3 * H), lambda b: (0, 0, 0)),    # bqkv
        pl.BlockSpec((L, H, H), lambda b: (0, 0, 0)),        # Wao
        pl.BlockSpec((L, 6, H), lambda b: (0, 0, 0)),        # [bao,g1,be1,bfo,g2,be2]
        pl.BlockSpec((L, H, I), lambda b: (0, 0, 0)),        # Wi
        pl.BlockSpec((L, 1, I), lambda b: (0, 0, 0)),        # bi
        pl.BlockSpec((L, I, H), lambda b: (0, 0, 0)),        # Wfo
    ]
    out_specs = pl.BlockSpec((1, S, H), lambda b: (b, 0, 0))

    return pl.pallas_call(
        fused_roberta_kernel,
        out_shape=jax.ShapeDtypeStruct((B, S, H), jnp.float32),
        grid=(B,),
        in_specs=in_specs,
        out_specs=out_specs,
        compiler_params=pltpu.CompilerParams(
            dimension_semantics=("parallel",)),   # both v7x TensorCores split the batch
    )(h0, bias, packed["wqkv"], packed["bqkv"], packed["wao"], packed["vec"],
      packed["wi"], packed["bi"], packed["wfo"])


# ------------------------------ parameter init ---------------------------------
def init_params(key):
    def normal(k, shape):
        return (0.02 * jax.random.normal(k, shape, jnp.float32)).astype(jnp.float32)

    keys = jax.random.split(key, 3 + NUM_LAYERS)
    params = {
        "word_emb": normal(keys[0], (VOCAB, HIDDEN)),
        "pos_emb": normal(keys[1], (MAX_POS, HIDDEN)),
        "type_emb": normal(keys[2], (TYPE_VOCAB, HIDDEN)),
        "emb_ln_g": jnp.ones((HIDDEN,), jnp.float32),
        "emb_ln_b": jnp.zeros((HIDDEN,), jnp.float32),
        "layers": [],
    }
    for i in range(NUM_LAYERS):
        lk = jax.random.split(keys[3 + i], 6)
        layer = [
            normal(lk[0], (HIDDEN, HIDDEN)), jnp.zeros((HIDDEN,), jnp.float32),       # Wq, bq
            normal(lk[1], (HIDDEN, HIDDEN)), jnp.zeros((HIDDEN,), jnp.float32),       # Wk, bk
            normal(lk[2], (HIDDEN, HIDDEN)), jnp.zeros((HIDDEN,), jnp.float32),       # Wv, bv
            normal(lk[3], (HIDDEN, HIDDEN)), jnp.zeros((HIDDEN,), jnp.float32),       # attn out
            jnp.ones((HIDDEN,), jnp.float32), jnp.zeros((HIDDEN,), jnp.float32),      # LN1 g, b
            normal(lk[4], (HIDDEN, INTERMEDIATE)), jnp.zeros((INTERMEDIATE,), jnp.float32),
            normal(lk[5], (INTERMEDIATE, HIDDEN)), jnp.zeros((HIDDEN,), jnp.float32),
            jnp.ones((HIDDEN,), jnp.float32), jnp.zeros((HIDDEN,), jnp.float32),      # LN2 g, b
        ]
        params["layers"].append(layer)
    return params


def pack_params(params):
    """Stack per-layer weights along a leading NUM_LAYERS axis, fuse Q|K|V into
    one lane-dense (H, 3H) slab, fold 1/sqrt(head_dim) into Wq/bq, and cast the
    matmul weights to bf16 (biases / LN params stay f32)."""
    scale = 1.0 / (HEAD_DIM ** 0.5)

    wqkv, bqkv, wao, vec, wi, bi, wfo = [], [], [], [], [], [], []
    for lp in params["layers"]:
        (wq, bq, wk, bk, wv, bv, w_ao, b_ao, g1, be1,
         w_i, b_i, w_fo, b_fo, g2, be2) = lp
        wqkv.append(jnp.concatenate([wq * scale, wk, wv], axis=1))         # (H, 3H)
        bqkv.append(jnp.concatenate([bq * scale, bk, bv], axis=0)[None])   # (1, 3H)
        wao.append(w_ao)                                                    # (H, H)
        vec.append(jnp.stack([b_ao, g1, be1, b_fo, g2, be2], axis=0))       # (6, H)
        wi.append(w_i)
        bi.append(b_i[None, :])
        wfo.append(w_fo)

    return {
        "word_emb": params["word_emb"],
        "pos_emb": params["pos_emb"],
        "type_emb": params["type_emb"],
        "emb_ln_g": params["emb_ln_g"],
        "emb_ln_b": params["emb_ln_b"],
        "wqkv": jnp.stack(wqkv).astype(jnp.bfloat16),   # (L, H, 3H)
        "bqkv": jnp.stack(bqkv).astype(jnp.float32),    # (L, 1, 3H)
        "wao":  jnp.stack(wao).astype(jnp.bfloat16),    # (L, H, H)
        "vec":  jnp.stack(vec).astype(jnp.float32),     # (L, 6, H)
        "wi":   jnp.stack(wi).astype(jnp.bfloat16),     # (L, H, I)
        "bi":   jnp.stack(bi).astype(jnp.float32),      # (L, 1, I)
        "wfo":  jnp.stack(wfo).astype(jnp.bfloat16),    # (L, I, H)
    }


# ------------------------------ module forward ----------------------------------
def roberta_base_layer_forward(words, mask, packed):
    """Equivalent of RobertaBaseLayer.forward: return last hidden state (B, S, H)."""
    B, S = words.shape
    # RoBERTa padding-aware position ids: cumsum(non-pad)*non-pad + pad_id
    pos_mask = (words != PAD_ID).astype(jnp.int32)
    position_ids = jnp.cumsum(pos_mask, axis=1) * pos_mask + PAD_ID
    emb = (packed["word_emb"][words]
           + packed["pos_emb"][position_ids]
           + packed["type_emb"][0][None, None, :]).astype(jnp.float32)
    # Embedding LayerNorm in plain XLA (tiny tensor) — kernel starts from h0.
    h0 = _layernorm(emb, packed["emb_ln_g"], packed["emb_ln_b"])
    # Additive attention bias from the (arbitrary) attention mask, built once here.
    bias = jnp.where(mask.astype(bool), 0.0, -1e9).astype(jnp.float32).reshape(B, 1, S)
    return fused_forward(h0, bias, packed)


# ----------------------------------- main ---------------------------------------
if __name__ == "__main__":
    B, S = 2, 16
    key = jax.random.PRNGKey(0)
    k_param, k_tok = jax.random.split(key)

    params = init_params(k_param)
    packed = pack_params(params)

    # deterministic synthetic token ids + attention mask (pad the tail)
    words = jax.random.randint(k_tok, (B, S), 3, VOCAB, dtype=jnp.int32)
    lengths = jnp.array([S, S - 5], dtype=jnp.int32)
    pos = jnp.arange(S, dtype=jnp.int32)[None, :]
    mask = (pos < lengths[:, None]).astype(jnp.int32)
    words = jnp.where(mask == 1, words, PAD_ID)

    fwd = jax.jit(roberta_base_layer_forward)
    out = fwd(words, mask, packed)
    out = jax.block_until_ready(out)
    assert out.shape == (B, S, HIDDEN)
    assert bool(jnp.all(jnp.isfinite(out)))
    print("KERNEL_OK")
</pallas_src>

<mosaic_0001>
module attributes {stable_mosaic.version = 11 : i64} {
  func.func @fused_roberta_kernel(%arg0: i32, %arg1: memref<1x16x128xf32, #tpu.memory_space<vmem>>, %arg2: memref<1x1x16xf32, #tpu.memory_space<vmem>>, %arg3: memref<2x128x384xbf16, #tpu.memory_space<vmem>>, %arg4: memref<2x1x384xf32, #tpu.memory_space<vmem>>, %arg5: memref<2x128x128xbf16, #tpu.memory_space<vmem>>, %arg6: memref<2x6x128xf32, #tpu.memory_space<vmem>>, %arg7: memref<2x128x256xbf16, #tpu.memory_space<vmem>>, %arg8: memref<2x1x256xf32, #tpu.memory_space<vmem>>, %arg9: memref<2x256x128xbf16, #tpu.memory_space<vmem>>, %arg10: memref<1x16x128xf32, #tpu.memory_space<vmem>>) attributes {dimension_semantics = [#tpu.dimension_semantics<parallel>], iteration_bounds = array<i64: 2>, scalar_prefetch = 0 : i64, scratch_operands = 0 : i64, tpu.core_type = #tpu.core_type<tc>, window_params = [{transform_indices = @transform_0, window_bounds = array<i64: 1, 16, 128>}, {transform_indices = @transform_1, window_bounds = array<i64: 1, 1, 16>}, {pipeline_mode = #tpu.pipeline_mode<synchronous>, transform_indices = @transform_2, window_bounds = array<i64: 2, 128, 384>}, {pipeline_mode = #tpu.pipeline_mode<synchronous>, transform_indices = @transform_3, window_bounds = array<i64: 2, 1, 384>}, {pipeline_mode = #tpu.pipeline_mode<synchronous>, transform_indices = @transform_4, window_bounds = array<i64: 2, 128, 128>}, {pipeline_mode = #tpu.pipeline_mode<synchronous>, transform_indices = @transform_5, window_bounds = array<i64: 2, 6, 128>}, {pipeline_mode = #tpu.pipeline_mode<synchronous>, transform_indices = @transform_6, window_bounds = array<i64: 2, 128, 256>}, {pipeline_mode = #tpu.pipeline_mode<synchronous>, transform_indices = @transform_7, window_bounds = array<i64: 2, 1, 256>}, {pipeline_mode = #tpu.pipeline_mode<synchronous>, transform_indices = @transform_8, window_bounds = array<i64: 2, 256, 128>}, {transform_indices = @transform_9, window_bounds = array<i64: 1, 16, 128>}]} {
    %c0 = arith.constant 0 : index
    %c0_0 = arith.constant 0 : index
    %c0_1 = arith.constant 0 : index
    %0 = vector.load %arg2[%c0, %c0_0, %c0_1] : memref<1x1x16xf32, #tpu.memory_space<vmem>>, vector<1x1x16xf32>
    %c0_2 = arith.constant 0 : index
    %c0_3 = arith.constant 0 : index
    %c0_4 = arith.constant 0 : index
    %1 = vector.load %arg1[%c0_2, %c0_3, %c0_4] : memref<1x16x128xf32, #tpu.memory_space<vmem>>, vector<1x16x128xf32>
    %2 = vector.shape_cast %1 : vector<1x16x128xf32> to vector<16x128xf32>
    %3 = arith.truncf %2 : vector<16x128xf32> to vector<16x128xbf16>
    %c0_5 = arith.constant 0 : index
    %c0_6 = arith.constant 0 : index
    %c0_7 = arith.constant 0 : index
    %4 = vector.load %arg3[%c0_5, %c0_6, %c0_7] : memref<2x128x384xbf16, #tpu.memory_space<vmem>>, vector<1x128x384xbf16>
    %5 = vector.shape_cast %4 : vector<1x128x384xbf16> to vector<128x384xbf16>
    %cst = arith.constant dense<0.000000e+00> : vector<16x384xf32>
    %6 = tpu.matmul %3, %5, %cst {dimension_numbers = #tpu.dot_dimension_numbers<[1], [0], [0], [1], [0, 0, 1, 1], [], []>} : vector<16x128xbf16>, vector<128x384xbf16>, vector<16x384xf32> -> vector<16x384xf32>
    %c0_8 = arith.constant 0 : index
    %c0_9 = arith.constant 0 : index
    %c0_10 = arith.constant 0 : index
    %7 = vector.load %arg4[%c0_8, %c0_9, %c0_10] : memref<2x1x384xf32, #tpu.memory_space<vmem>>, vector<1x1x384xf32>
    %8 = vector.shape_cast %7 : vector<1x1x384xf32> to vector<384xf32>
    %9 = vector.shape_cast %8 : vector<384xf32> to vector<1x384xf32>
    %10 = vector.broadcast %9 : vector<1x384xf32> to vector<16x384xf32>
    %11 = arith.addf %6, %10 : vector<16x384xf32>
    %12 = vector.extract_strided_slice %11 {offsets = [0, 0], sizes = [16, 128], strides = [1, 1]} : vector<16x384xf32> to vector<16x128xf32>
    %13 = arith.truncf %12 : vector<16x128xf32> to vector<16x128xbf16>
    %14 = vector.extract_strided_slice %11 {offsets = [0, 128], sizes = [16, 128], strides = [1, 1]} : vector<16x384xf32> to vector<16x128xf32>
    %15 = arith.truncf %14 : vector<16x128xf32> to vector<16x128xbf16>
    %16 = vector.extract_strided_slice %11 {offsets = [0, 256], sizes = [16, 128], strides = [1, 1]} : vector<16x384xf32> to vector<16x128xf32>
    %17 = arith.truncf %16 : vector<16x128xf32> to vector<16x128xbf16>
    %18 = vector.extract_strided_slice %13 {offsets = [0, 0], sizes = [16, 32], strides = [1, 1]} : vector<16x128xbf16> to vector<16x32xbf16>
    %19 = vector.extract_strided_slice %15 {offsets = [0, 0], sizes = [16, 32], strides = [1, 1]} : vector<16x128xbf16> to vector<16x32xbf16>
    %cst_11 = arith.constant dense<0.000000e+00> : vector<16x16xf32>
    %20 = tpu.matmul %18, %19, %cst_11 {dimension_numbers = #tpu.dot_dimension_numbers<[1], [1], [0], [0], [0, 0, 1, 0], [], []>} : vector<16x32xbf16>, vector<16x32xbf16>, vector<16x16xf32> -> vector<16x16xf32>
    %21 = vector.extract_strided_slice %13 {offsets = [0, 32], sizes = [16, 32], strides = [1, 1]} : vector<16x128xbf16> to vector<16x32xbf16>
    %22 = vector.extract_strided_slice %15 {offsets = [0, 32], sizes = [16, 32], strides = [1, 1]} : vector<16x128xbf16> to vector<16x32xbf16>
    %cst_12 = arith.constant dense<0.000000e+00> : vector<16x16xf32>
    %23 = tpu.matmul %21, %22, %cst_12 {dimension_numbers = #tpu.dot_dimension_numbers<[1], [1], [0], [0], [0, 0, 1, 0], [], []>} : vector<16x32xbf16>, vector<16x32xbf16>, vector<16x16xf32> -> vector<16x16xf32>
    %24 = vector.extract_strided_slice %13 {offsets = [0, 64], sizes = [16, 32], strides = [1, 1]} : vector<16x128xbf16> to vector<16x32xbf16>
    %25 = vector.extract_strided_slice %15 {offsets = [0, 64], sizes = [16, 32], strides = [1, 1]} : vector<16x128xbf16> to vector<16x32xbf16>
    %cst_13 = arith.constant dense<0.000000e+00> : vector<16x16xf32>
    %26 = tpu.matmul %24, %25, %cst_13 {dimension_numbers = #tpu.dot_dimension_numbers<[1], [1], [0], [0], [0, 0, 1, 0], [], []>} : vector<16x32xbf16>, vector<16x32xbf16>, vector<16x16xf32> -> vector<16x16xf32>
    %27 = vector.extract_strided_slice %13 {offsets = [0, 96], sizes = [16, 32], strides = [1, 1]} : vector<16x128xbf16> to vector<16x32xbf16>
    %28 = vector.extract_strided_slice %15 {offsets = [0, 96], sizes = [16, 32], strides = [1, 1]} : vector<16x128xbf16> to vector<16x32xbf16>
    %cst_14 = arith.constant dense<0.000000e+00> : vector<16x16xf32>
    %29 = tpu.matmul %27, %28, %cst_14 {dimension_numbers = #tpu.dot_dimension_numbers<[1], [1], [0], [0], [0, 0, 1, 0], [], []>} : vector<16x32xbf16>, vector<16x32xbf16>, vector<16x16xf32> -> vector<16x16xf32>
    %30 = vector.shape_cast %20 : vector<16x16xf32> to vector<1x16x16xf32>
    %31 = vector.shape_cast %23 : vector<16x16xf32> to vector<1x16x16xf32>
    %32 = vector.shape_cast %26 : vector<16x16xf32> to vector<1x16x16xf32>
    %33 = vector.shape_cast %29 : vector<16x16xf32> to vector<1x16x16xf32>
    %34 = tpu.concatenate %30, %31, %32, %33 in 0 : vector<1x16x16xf32>, vector<1x16x16xf32>, vector<1x16x16xf32>, vector<1x16x16xf32> -> vector<4x16x16xf32>
    %35 = vector.broadcast %0 : vector<1x1x16xf32> to vector<4x16x16xf32>
    %36 = arith.addf %34, %35 : vector<4x16x16xf32>
    %cst_15 = arith.constant dense<0xFF800000> : vector<4x16xf32>
    %37 = vector.multi_reduction <maximumf>, %36, %cst_15 [2] : vector<4x16x16xf32> to vector<4x16xf32>
    %38 = vector.shape_cast %37 : vector<4x16xf32> to vector<4x16x1xf32>
    %39 = vector.broadcast %38 : vector<4x16x1xf32> to vector<4x16x16xf32>
    %40 = arith.subf %36, %39 : vector<4x16x16xf32>
    %41 = math.exp %40 : vector<4x16x16xf32>
    %cst_16 = arith.constant dense<0.000000e+00> : vector<4x16xf32>
    %42 = vector.multi_reduction <add>, %41, %cst_16 [2] : vector<4x16x16xf32> to vector<4x16xf32>
    %43 = vector.shape_cast %42 : vector<4x16xf32> to vector<4x16x1xf32>
    %44 = tpu.reciprocal %43 {approx = true} : vector<4x16x1xf32> -> vector<4x16x1xf32>
    %45 = vector.broadcast %44 : vector<4x16x1xf32> to vector<4x16x16xf32>
    %46 = arith.mulf %41, %45 : vector<4x16x16xf32>
    %47 = arith.truncf %46 : vector<4x16x16xf32> to vector<4x16x16xbf16>
    %48 = vector.extract_strided_slice %47 {offsets = [0, 0, 0], sizes = [1, 16, 16], strides = [1, 1, 1]} : vector<4x16x16xbf16> to vector<1x16x16xbf16>
    %49 = vector.shape_cast %48 : vector<1x16x16xbf16> to vector<16x16xbf16>
    %50 = vector.extract_strided_slice %17 {offsets = [0, 0], sizes = [16, 32], strides = [1, 1]} : vector<16x128xbf16> to vector<16x32xbf16>
    %cst_17 = arith.constant dense<0.000000e+00> : vector<16x32xf32>
    %51 = tpu.matmul %49, %50, %cst_17 {dimension_numbers = #tpu.dot_dimension_numbers<[1], [0], [0], [1], [0, 0, 1, 1], [], []>} : vector<16x16xbf16>, vector<16x32xbf16>, vector<16x32xf32> -> vector<16x32xf32>
    %52 = vector.extract_strided_slice %47 {offsets = [1, 0, 0], sizes = [1, 16, 16], strides = [1, 1, 1]} : vector<4x16x16xbf16> to vector<1x16x16xbf16>
    %53 = vector.shape_cast %52 : vector<1x16x16xbf16> to vector<16x16xbf16>
    %54 = vector.extract_strided_slice %17 {offsets = [0, 32], sizes = [16, 32], strides = [1, 1]} : vector<16x128xbf16> to vector<16x32xbf16>
    %cst_18 = arith.constant dense<0.000000e+00> : vector<16x32xf32>
    %55 = tpu.matmul %53, %54, %cst_18 {dimension_numbers = #tpu.dot_dimension_numbers<[1], [0], [0], [1], [0, 0, 1, 1], [], []>} : vector<16x16xbf16>, vector<16x32xbf16>, vector<16x32xf32> -> vector<16x32xf32>
    %56 = vector.extract_strided_slice %47 {offsets = [2, 0, 0], sizes = [1, 16, 16], strides = [1, 1, 1]} : vector<4x16x16xbf16> to vector<1x16x16xbf16>
    %57 = vector.shape_cast %56 : vector<1x16x16xbf16> to vector<16x16xbf16>
    %58 = vector.extract_strided_slice %17 {offsets = [0, 64], sizes = [16, 32], strides = [1, 1]} : vector<16x128xbf16> to vector<16x32xbf16>
    %cst_19 = arith.constant dense<0.000000e+00> : vector<16x32xf32>
    %59 = tpu.matmul %57, %58, %cst_19 {dimension_numbers = #tpu.dot_dimension_numbers<[1], [0], [0], [1], [0, 0, 1, 1], [], []>} : vector<16x16xbf16>, vector<16x32xbf16>, vector<16x32xf32> -> vector<16x32xf32>
    %60 = vector.extract_strided_slice %47 {offsets = [3, 0, 0], sizes = [1, 16, 16], strides = [1, 1, 1]} : vector<4x16x16xbf16> to vector<1x16x16xbf16>
    %61 = vector.shape_cast %60 : vector<1x16x16xbf16> to vector<16x16xbf16>
    %62 = vector.extract_strided_slice %17 {offsets = [0, 96], sizes = [16, 32], strides = [1, 1]} : vector<16x128xbf16> to vector<16x32xbf16>
    %cst_20 = arith.constant dense<0.000000e+00> : vector<16x32xf32>
    %63 = tpu.matmul %61, %62, %cst_20 {dimension_numbers = #tpu.dot_dimension_numbers<[1], [0], [0], [1], [0, 0, 1, 1], [], []>} : vector<16x16xbf16>, vector<16x32xbf16>, vector<16x32xf32> -> vector<16x32xf32>
    %64 = tpu.concatenate %51, %55, %59, %63 in 1 : vector<16x32xf32>, vector<16x32xf32>, vector<16x32xf32>, vector<16x32xf32> -> vector<16x128xf32>
    %65 = arith.truncf %64 : vector<16x128xf32> to vector<16x128xbf16>
    %c0_21 = arith.constant 0 : index
    %c0_22 = arith.constant 0 : index
    %c0_23 = arith.constant 0 : index
    %66 = vector.load %arg5[%c0_21, %c0_22, %c0_23] : memref<2x128x128xbf16, #tpu.memory_space<vmem>>, vector<1x128x128xbf16>
    %67 = vector.shape_cast %66 : vector<1x128x128xbf16> to vector<128x128xbf16>
    %cst_24 = arith.constant dense<0.000000e+00> : vector<16x128xf32>
    %68 = tpu.matmul %65, %67, %cst_24 {dimension_numbers = #tpu.dot_dimension_numbers<[1], [0], [0], [1], [0, 0, 1, 1], [], []>} : vector<16x128xbf16>, vector<128x128xbf16>, vector<16x128xf32> -> vector<16x128xf32>
    %c0_25 = arith.constant 0 : index
    %c0_26 = arith.constant 0 : index
    %c0_27 = arith.constant 0 : index
    %69 = vector.load %arg6[%c0_25, %c0_26, %c0_27] : memref<2x6x128xf32, #tpu.memory_space<vmem>>, vector<1x1x128xf32>
    %70 = vector.shape_cast %69 : vector<1x1x128xf32> to vector<128xf32>
    %71 = vector.shape_cast %70 : vector<128xf32> to vector<1x128xf32>
    %72 = vector.broadcast %71 : vector<1x128xf32> to vector<16x128xf32>
    %73 = arith.addf %68, %72 : vector<16x128xf32>
    %74 = arith.addf %2, %73 : vector<16x128xf32>
    %c0_28 = arith.constant 0 : index
    %c1 = arith.constant 1 : index
    %c0_29 = arith.constant 0 : index
    %75 = vector.load %arg6[%c0_28, %c1, %c0_29] : memref<2x6x128xf32, #tpu.memory_space<vmem>>, vector<1x1x128xf32>
    %76 = vector.shape_cast %75 : vector<1x1x128xf32> to vector<128xf32>
    %c0_30 = arith.constant 0 : index
    %c2 = arith.constant 2 : index
    %c0_31 = arith.constant 0 : index
    %77 = vector.load %arg6[%c0_30, %c2, %c0_31] : memref<2x6x128xf32, #tpu.memory_space<vmem>>, vector<1x1x128xf32>
    %78 = vector.shape_cast %77 : vector<1x1x128xf32> to vector<128xf32>
    %cst_32 = arith.constant dense<0.000000e+00> : vector<16xf32>
    %79 = vector.multi_reduction <add>, %74, %cst_32 [1] : vector<16x128xf32> to vector<16xf32>
    %80 = vector.shape_cast %79 : vector<16xf32> to vector<16x1xf32>
    %cst_33 = arith.constant 1.280000e+02 : f32
    %81 = vector.broadcast %cst_33 : f32 to vector<16x1xf32>
    %82 = arith.divf %80, %81 : vector<16x1xf32>
    %83 = vector.broadcast %82 : vector<16x1xf32> to vector<16x128xf32>
    %84 = arith.subf %74, %83 : vector<16x128xf32>
    %85 = arith.mulf %84, %84 : vector<16x128xf32>
    %cst_34 = arith.constant dense<0.000000e+00> : vector<16xf32>
    %86 = vector.multi_reduction <add>, %85, %cst_34 [1] : vector<16x128xf32> to vector<16xf32>
    %87 = vector.shape_cast %86 : vector<16xf32> to vector<16x1xf32>
    %cst_35 = arith.constant 1.280000e+02 : f32
    %88 = vector.broadcast %cst_35 : f32 to vector<16x1xf32>
    %89 = arith.divf %87, %88 : vector<16x1xf32>
    %90 = vector.broadcast %82 : vector<16x1xf32> to vector<16x128xf32>
    %91 = arith.subf %74, %90 : vector<16x128xf32>
    %cst_36 = arith.constant 9.99999974E-6 : f32
    %92 = vector.broadcast %cst_36 : f32 to vector<16x1xf32>
    %93 = arith.addf %89, %92 : vector<16x1xf32>
    %94 = math.rsqrt %93 : vector<16x1xf32>
    %95 = vector.broadcast %94 : vector<16x1xf32> to vector<16x128xf32>
    %96 = arith.mulf %91, %95 : vector<16x128xf32>
    %97 = vector.shape_cast %76 : vector<128xf32> to vector<1x128xf32>
    %98 = vector.broadcast %97 : vector<1x128xf32> to vector<16x128xf32>
    %99 = arith.mulf %96, %98 : vector<16x128xf32>
    %100 = vector.shape_cast %78 : vector<128xf32> to vector<1x128xf32>
    %101 = vector.broadcast %100 : vector<1x128xf32> to vector<16x128xf32>
    %102 = arith.addf %99, %101 : vector<16x128xf32>
    %103 = arith.truncf %102 : vector<16x128xf32> to vector<16x128xbf16>
    %c0_37 = arith.constant 0 : index
    %c0_38 = arith.constant 0 : index
    %c0_39 = arith.constant 0 : index
    %104 = vector.load %arg7[%c0_37, %c0_38, %c0_39] : memref<2x128x256xbf16, #tpu.memory_space<vmem>>, vector<1x128x256xbf16>
    %105 = vector.shape_cast %104 : vector<1x128x256xbf16> to vector<128x256xbf16>
    %cst_40 = arith.constant dense<0.000000e+00> : vector<16x256xf32>
    %106 = tpu.matmul %103, %105, %cst_40 {dimension_numbers = #tpu.dot_dimension_numbers<[1], [0], [0], [1], [0, 0, 1, 1], [], []>} : vector<16x128xbf16>, vector<128x256xbf16>, vector<16x256xf32> -> vector<16x256xf32>
    %c0_41 = arith.constant 0 : index
    %c0_42 = arith.constant 0 : index
    %c0_43 = arith.constant 0 : index
    %107 = vector.load %arg8[%c0_41, %c0_42, %c0_43] : memref<2x1x256xf32, #tpu.memory_space<vmem>>, vector<1x1x256xf32>
    %108 = vector.shape_cast %107 : vector<1x1x256xf32> to vector<256xf32>
    %109 = vector.shape_cast %108 : vector<256xf32> to vector<1x256xf32>
    %110 = vector.broadcast %109 : vector<1x256xf32> to vector<16x256xf32>
    %111 = arith.addf %106, %110 : vector<16x256xf32>
    %cst_44 = arith.constant 5.000000e-01 : f32
    %112 = vector.broadcast %cst_44 : f32 to vector<16x256xf32>
    %113 = arith.mulf %112, %111 : vector<16x256xf32>
    %cst_45 = arith.constant 4.471500e-02 : f32
    %114 = vector.broadcast %cst_45 : f32 to vector<16x256xf32>
    %115 = arith.mulf %114, %111 : vector<16x256xf32>
    %116 = arith.mulf %115, %111 : vector<16x256xf32>
    %117 = arith.mulf %116, %111 : vector<16x256xf32>
    %118 = arith.addf %111, %117 : vector<16x256xf32>
    %cst_46 = arith.constant 0.797884583 : f32
    %119 = vector.broadcast %cst_46 : f32 to vector<16x256xf32>
    %120 = arith.mulf %119, %118 : vector<16x256xf32>
    %121 = math.tanh %120 : vector<16x256xf32>
    %cst_47 = arith.constant 1.000000e+00 : f32
    %122 = vector.broadcast %cst_47 : f32 to vector<16x256xf32>
    %123 = arith.addf %122, %121 : vector<16x256xf32>
    %124 = arith.mulf %113, %123 : vector<16x256xf32>
    %125 = arith.truncf %124 : vector<16x256xf32> to vector<16x256xbf16>
    %c0_48 = arith.constant 0 : index
    %c0_49 = arith.constant 0 : index
    %c0_50 = arith.constant 0 : index
    %126 = vector.load %arg9[%c0_48, %c0_49, %c0_50] : memref<2x256x128xbf16, #tpu.memory_space<vmem>>, vector<1x256x128xbf16>
    %127 = vector.shape_cast %126 : vector<1x256x128xbf16> to vector<256x128xbf16>
    %cst_51 = arith.constant dense<0.000000e+00> : vector<16x128xf32>
    %128 = tpu.matmul %125, %127, %cst_51 {dimension_numbers = #tpu.dot_dimension_numbers<[1], [0], [0], [1], [0, 0, 1, 1], [], []>} : vector<16x256xbf16>, vector<256x128xbf16>, vector<16x128xf32> -> vector<16x128xf32>
    %c0_52 = arith.constant 0 : index
    %c3 = arith.constant 3 : index
    %c0_53 = arith.constant 0 : index
    %129 = vector.load %arg6[%c0_52, %c3, %c0_53] : memref<2x6x128xf32, #tpu.memory_space<vmem>>, vector<1x1x128xf32>
    %130 = vector.shape_cast %129 : vector<1x1x128xf32> to vector<128xf32>
    %131 = vector.shape_cast %130 : vector<128xf32> to vector<1x128xf32>
    %132 = vector.broadcast %131 : vector<1x128xf32> to vector<16x128xf32>
    %133 = arith.addf %128, %132 : vector<16x128xf32>
    %134 = arith.addf %102, %133 : vector<16x128xf32>
    %c0_54 = arith.constant 0 : index
    %c4 = arith.constant 4 : index
    %c0_55 = arith.constant 0 : index
    %135 = vector.load %arg6[%c0_54, %c4, %c0_55] : memref<2x6x128xf32, #tpu.memory_space<vmem>>, vector<1x1x128xf32>
    %136 = vector.shape_cast %135 : vector<1x1x128xf32> to vector<128xf32>
    %c0_56 = arith.constant 0 : index
    %c5 = arith.constant 5 : index
    %c0_57 = arith.constant 0 : index
    %137 = vector.load %arg6[%c0_56, %c5, %c0_57] : memref<2x6x128xf32, #tpu.memory_space<vmem>>, vector<1x1x128xf32>
    %138 = vector.shape_cast %137 : vector<1x1x128xf32> to vector<128xf32>
    %cst_58 = arith.constant dense<0.000000e+00> : vector<16xf32>
    %139 = vector.multi_reduction <add>, %134, %cst_58 [1] : vector<16x128xf32> to vector<16xf32>
    %140 = vector.shape_cast %139 : vector<16xf32> to vector<16x1xf32>
    %cst_59 = arith.constant 1.280000e+02 : f32
    %141 = vector.broadcast %cst_59 : f32 to vector<16x1xf32>
    %142 = arith.divf %140, %141 : vector<16x1xf32>
    %143 = vector.broadcast %142 : vector<16x1xf32> to vector<16x128xf32>
    %144 = arith.subf %134, %143 : vector<16x128xf32>
    %145 = arith.mulf %144, %144 : vector<16x128xf32>
    %cst_60 = arith.constant dense<0.000000e+00> : vector<16xf32>
    %146 = vector.multi_reduction <add>, %145, %cst_60 [1] : vector<16x128xf32> to vector<16xf32>
    %147 = vector.shape_cast %146 : vector<16xf32> to vector<16x1xf32>
    %cst_61 = arith.constant 1.280000e+02 : f32
    %148 = vector.broadcast %cst_61 : f32 to vector<16x1xf32>
    %149 = arith.divf %147, %148 : vector<16x1xf32>
    %150 = vector.broadcast %142 : vector<16x1xf32> to vector<16x128xf32>
    %151 = arith.subf %134, %150 : vector<16x128xf32>
    %cst_62 = arith.constant 9.99999974E-6 : f32
    %152 = vector.broadcast %cst_62 : f32 to vector<16x1xf32>
    %153 = arith.addf %149, %152 : vector<16x1xf32>
    %154 = math.rsqrt %153 : vector<16x1xf32>
    %155 = vector.broadcast %154 : vector<16x1xf32> to vector<16x128xf32>
    %156 = arith.mulf %151, %155 : vector<16x128xf32>
    %157 = vector.shape_cast %136 : vector<128xf32> to vector<1x128xf32>
    %158 = vector.broadcast %157 : vector<1x128xf32> to vector<16x128xf32>
    %159 = arith.mulf %156, %158 : vector<16x128xf32>
    %160 = vector.shape_cast %138 : vector<128xf32> to vector<1x128xf32>
    %161 = vector.broadcast %160 : vector<1x128xf32> to vector<16x128xf32>
    %162 = arith.addf %159, %161 : vector<16x128xf32>
    %163 = arith.truncf %162 : vector<16x128xf32> to vector<16x128xbf16>
    %c1_63 = arith.constant 1 : index
    %c0_64 = arith.constant 0 : index
    %c0_65 = arith.constant 0 : index
    %164 = vector.load %arg3[%c1_63, %c0_64, %c0_65] : memref<2x128x384xbf16, #tpu.memory_space<vmem>>, vector<1x128x384xbf16>
    %165 = vector.shape_cast %164 : vector<1x128x384xbf16> to vector<128x384xbf16>
    %cst_66 = arith.constant dense<0.000000e+00> : vector<16x384xf32>
    %166 = tpu.matmul %163, %165, %cst_66 {dimension_numbers = #tpu.dot_dimension_numbers<[1], [0], [0], [1], [0, 0, 1, 1], [], []>} : vector<16x128xbf16>, vector<128x384xbf16>, vector<16x384xf32> -> vector<16x384xf32>
    %c1_67 = arith.constant 1 : index
    %c0_68 = arith.constant 0 : index
    %c0_69 = arith.constant 0 : index
    %167 = vector.load %arg4[%c1_67, %c0_68, %c0_69] : memref<2x1x384xf32, #tpu.memory_space<vmem>>, vector<1x1x384xf32>
    %168 = vector.shape_cast %167 : vector<1x1x384xf32> to vector<384xf32>
    %169 = vector.shape_cast %168 : vector<384xf32> to vector<1x384xf32>
    %170 = vector.broadcast %169 : vector<1x384xf32> to vector<16x384xf32>
    %171 = arith.addf %166, %170 : vector<16x384xf32>
    %172 = vector.extract_strided_slice %171 {offsets = [0, 0], sizes = [16, 128], strides = [1, 1]} : vector<16x384xf32> to vector<16x128xf32>
    %173 = arith.truncf %172 : vector<16x128xf32> to vector<16x128xbf16>
    %174 = vector.extract_strided_slice %171 {offsets = [0, 128], sizes = [16, 128], strides = [1, 1]} : vector<16x384xf32> to vector<16x128xf32>
    %175 = arith.truncf %174 : vector<16x128xf32> to vector<16x128xbf16>
    %176 = vector.extract_strided_slice %171 {offsets = [0, 256], sizes = [16, 128], strides = [1, 1]} : vector<16x384xf32> to vector<16x128xf32>
    %177 = arith.truncf %176 : vector<16x128xf32> to vector<16x128xbf16>
    %178 = vector.extract_strided_slice %173 {offsets = [0, 0], sizes = [16, 32], strides = [1, 1]} : vector<16x128xbf16> to vector<16x32xbf16>
    %179 = vector.extract_strided_slice %175 {offsets = [0, 0], sizes = [16, 32], strides = [1, 1]} : vector<16x128xbf16> to vector<16x32xbf16>
    %cst_70 = arith.constant dense<0.000000e+00> : vector<16x16xf32>
    %180 = tpu.matmul %178, %179, %cst_70 {dimension_numbers = #tpu.dot_dimension_numbers<[1], [1], [0], [0], [0, 0, 1, 0], [], []>} : vector<16x32xbf16>, vector<16x32xbf16>, vector<16x16xf32> -> vector<16x16xf32>
    %181 = vector.extract_strided_slice %173 {offsets = [0, 32], sizes = [16, 32], strides = [1, 1]} : vector<16x128xbf16> to vector<16x32xbf16>
    %182 = vector.extract_strided_slice %175 {offsets = [0, 32], sizes = [16, 32], strides = [1, 1]} : vector<16x128xbf16> to vector<16x32xbf16>
    %cst_71 = arith.constant dense<0.000000e+00> : vector<16x16xf32>
    %183 = tpu.matmul %181, %182, %cst_71 {dimension_numbers = #tpu.dot_dimension_numbers<[1], [1], [0], [0], [0, 0, 1, 0], [], []>} : vector<16x32xbf16>, vector<16x32xbf16>, vector<16x16xf32> -> vector<16x16xf32>
    %184 = vector.extract_strided_slice %173 {offsets = [0, 64], sizes = [16, 32], strides = [1, 1]} : vector<16x128xbf16> to vector<16x32xbf16>
    %185 = vector.extract_strided_slice %175 {offsets = [0, 64], sizes = [16, 32], strides = [1, 1]} : vector<16x128xbf16> to vector<16x32xbf16>
    %cst_72 = arith.constant dense<0.000000e+00> : vector<16x16xf32>
    %186 = tpu.matmul %184, %185, %cst_72 {dimension_numbers = #tpu.dot_dimension_numbers<[1], [1], [0], [0], [0, 0, 1, 0], [], []>} : vector<16x32xbf16>, vector<16x32xbf16>, vector<16x16xf32> -> vector<16x16xf32>
    %187 = vector.extract_strided_slice %173 {offsets = [0, 96], sizes = [16, 32], strides = [1, 1]} : vector<16x128xbf16> to vector<16x32xbf16>
    %188 = vector.extract_strided_slice %175 {offsets = [0, 96], sizes = [16, 32], strides = [1, 1]} : vector<16x128xbf16> to vector<16x32xbf16>
    %cst_73 = arith.constant dense<0.000000e+00> : vector<16x16xf32>
    %189 = tpu.matmul %187, %188, %cst_73 {dimension_numbers = #tpu.dot_dimension_numbers<[1], [1], [0], [0], [0, 0, 1, 0], [], []>} : vector<16x32xbf16>, vector<16x32xbf16>, vector<16x16xf32> -> vector<16x16xf32>
    %190 = vector.shape_cast %180 : vector<16x16xf32> to vector<1x16x16xf32>
    %191 = vector.shape_cast %183 : vector<16x16xf32> to vector<1x16x16xf32>
    %192 = vector.shape_cast %186 : vector<16x16xf32> to vector<1x16x16xf32>
    %193 = vector.shape_cast %189 : vector<16x16xf32> to vector<1x16x16xf32>
    %194 = tpu.concatenate %190, %191, %192, %193 in 0 : vector<1x16x16xf32>, vector<1x16x16xf32>, vector<1x16x16xf32>, vector<1x16x16xf32> -> vector<4x16x16xf32>
    %195 = vector.broadcast %0 : vector<1x1x16xf32> to vector<4x16x16xf32>
    %196 = arith.addf %194, %195 : vector<4x16x16xf32>
    %cst_74 = arith.constant dense<0xFF800000> : vector<4x16xf32>
    %197 = vector.multi_reduction <maximumf>, %196, %cst_74 [2] : vector<4x16x16xf32> to vector<4x16xf32>
    %198 = vector.shape_cast %197 : vector<4x16xf32> to vector<4x16x1xf32>
    %199 = vector.broadcast %198 : vector<4x16x1xf32> to vector<4x16x16xf32>
    %200 = arith.subf %196, %199 : vector<4x16x16xf32>
    %201 = math.exp %200 : vector<4x16x16xf32>
    %cst_75 = arith.constant dense<0.000000e+00> : vector<4x16xf32>
    %202 = vector.multi_reduction <add>, %201, %cst_75 [2] : vector<4x16x16xf32> to vector<4x16xf32>
    %203 = vector.shape_cast %202 : vector<4x16xf32> to vector<4x16x1xf32>
    %204 = tpu.reciprocal %203 {approx = true} : vector<4x16x1xf32> -> vector<4x16x1xf32>
    %205 = vector.broadcast %204 : vector<4x16x1xf32> to vector<4x16x16xf32>
    %206 = arith.mulf %201, %205 : vector<4x16x16xf32>
    %207 = arith.truncf %206 : vector<4x16x16xf32> to vector<4x16x16xbf16>
    %208 = vector.extract_strided_slice %207 {offsets = [0, 0, 0], sizes = [1, 16, 16], strides = [1, 1, 1]} : vector<4x16x16xbf16> to vector<1x16x16xbf16>
    %209 = vector.shape_cast %208 : vector<1x16x16xbf16> to vector<16x16xbf16>
    %210 = vector.extract_strided_slice %177 {offsets = [0, 0], sizes = [16, 32], strides = [1, 1]} : vector<16x128xbf16> to vector<16x32xbf16>
    %cst_76 = arith.constant dense<0.000000e+00> : vector<16x32xf32>
    %211 = tpu.matmul %209, %210, %cst_76 {dimension_numbers = #tpu.dot_dimension_numbers<[1], [0], [0], [1], [0, 0, 1, 1], [], []>} : vector<16x16xbf16>, vector<16x32xbf16>, vector<16x32xf32> -> vector<16x32xf32>
    %212 = vector.extract_strided_slice %207 {offsets = [1, 0, 0], sizes = [1, 16, 16], strides = [1, 1, 1]} : vector<4x16x16xbf16> to vector<1x16x16xbf16>
    %213 = vector.shape_cast %212 : vector<1x16x16xbf16> to vector<16x16xbf16>
    %214 = vector.extract_strided_slice %177 {offsets = [0, 32], sizes = [16, 32], strides = [1, 1]} : vector<16x128xbf16> to vector<16x32xbf16>
    %cst_77 = arith.constant dense<0.000000e+00> : vector<16x32xf32>
    %215 = tpu.matmul %213, %214, %cst_77 {dimension_numbers = #tpu.dot_dimension_numbers<[1], [0], [0], [1], [0, 0, 1, 1], [], []>} : vector<16x16xbf16>, vector<16x32xbf16>, vector<16x32xf32> -> vector<16x32xf32>
    %216 = vector.extract_strided_slice %207 {offsets = [2, 0, 0], sizes = [1, 16, 16], strides = [1, 1, 1]} : vector<4x16x16xbf16> to vector<1x16x16xbf16>
    %217 = vector.shape_cast %216 : vector<1x16x16xbf16> to vector<16x16xbf16>
    %218 = vector.extract_strided_slice %177 {offsets = [0, 64], sizes = [16, 32], strides = [1, 1]} : vector<16x128xbf16> to vector<16x32xbf16>
    %cst_78 = arith.constant dense<0.000000e+00> : vector<16x32xf32>
    %219 = tpu.matmul %217, %218, %cst_78 {dimension_numbers = #tpu.dot_dimension_numbers<[1], [0], [0], [1], [0, 0, 1, 1], [], []>} : vector<16x16xbf16>, vector<16x32xbf16>, vector<16x32xf32> -> vector<16x32xf32>
    %220 = vector.extract_strided_slice %207 {offsets = [3, 0, 0], sizes = [1, 16, 16], strides = [1, 1, 1]} : vector<4x16x16xbf16> to vector<1x16x16xbf16>
    %221 = vector.shape_cast %220 : vector<1x16x16xbf16> to vector<16x16xbf16>
    %222 = vector.extract_strided_slice %177 {offsets = [0, 96], sizes = [16, 32], strides = [1, 1]} : vector<16x128xbf16> to vector<16x32xbf16>
    %cst_79 = arith.constant dense<0.000000e+00> : vector<16x32xf32>
    %223 = tpu.matmul %221, %222, %cst_79 {dimension_numbers = #tpu.dot_dimension_numbers<[1], [0], [0], [1], [0, 0, 1, 1], [], []>} : vector<16x16xbf16>, vector<16x32xbf16>, vector<16x32xf32> -> vector<16x32xf32>
    %224 = tpu.concatenate %211, %215, %219, %223 in 1 : vector<16x32xf32>, vector<16x32xf32>, vector<16x32xf32>, vector<16x32xf32> -> vector<16x128xf32>
    %225 = arith.truncf %224 : vector<16x128xf32> to vector<16x128xbf16>
    %c1_80 = arith.constant 1 : index
    %c0_81 = arith.constant 0 : index
    %c0_82 = arith.constant 0 : index
    %226 = vector.load %arg5[%c1_80, %c0_81, %c0_82] : memref<2x128x128xbf16, #tpu.memory_space<vmem>>, vector<1x128x128xbf16>
    %227 = vector.shape_cast %226 : vector<1x128x128xbf16> to vector<128x128xbf16>
    %cst_83 = arith.constant dense<0.000000e+00> : vector<16x128xf32>
    %228 = tpu.matmul %225, %227, %cst_83 {dimension_numbers = #tpu.dot_dimension_numbers<[1], [0], [0], [1], [0, 0, 1, 1], [], []>} : vector<16x128xbf16>, vector<128x128xbf16>, vector<16x128xf32> -> vector<16x128xf32>
    %c1_84 = arith.constant 1 : index
    %c0_85 = arith.constant 0 : index
    %c0_86 = arith.constant 0 : index
    %229 = vector.load %arg6[%c1_84, %c0_85, %c0_86] : memref<2x6x128xf32, #tpu.memory_space<vmem>>, vector<1x1x128xf32>
    %230 = vector.shape_cast %229 : vector<1x1x128xf32> to vector<128xf32>
    %231 = vector.shape_cast %230 : vector<128xf32> to vector<1x128xf32>
    %232 = vector.broadcast %231 : vector<1x128xf32> to vector<16x128xf32>
    %233 = arith.addf %228, %232 : vector<16x128xf32>
    %234 = arith.addf %162, %233 : vector<16x128xf32>
    %c1_87 = arith.constant 1 : index
    %c1_88 = arith.constant 1 : index
    %c0_89 = arith.constant 0 : index
    %235 = vector.load %arg6[%c1_87, %c1_88, %c0_89] : memref<2x6x128xf32, #tpu.memory_space<vmem>>, vector<1x1x128xf32>
    %236 = vector.shape_cast %235 : vector<1x1x128xf32> to vector<128xf32>
    %c1_90 = arith.constant 1 : index
    %c2_91 = arith.constant 2 : index
    %c0_92 = arith.constant 0 : index
    %237 = vector.load %arg6[%c1_90, %c2_91, %c0_92] : memref<2x6x128xf32, #tpu.memory_space<vmem>>, vector<1x1x128xf32>
    %238 = vector.shape_cast %237 : vector<1x1x128xf32> to vector<128xf32>
    %cst_93 = arith.constant dense<0.000000e+00> : vector<16xf32>
    %239 = vector.multi_reduction <add>, %234, %cst_93 [1] : vector<16x128xf32> to vector<16xf32>
    %240 = vector.shape_cast %239 : vector<16xf32> to vector<16x1xf32>
    %cst_94 = arith.constant 1.280000e+02 : f32
    %241 = vector.broadcast %cst_94 : f32 to vector<16x1xf32>
    %242 = arith.divf %240, %241 : vector<16x1xf32>
    %243 = vector.broadcast %242 : vector<16x1xf32> to vector<16x128xf32>
    %244 = arith.subf %234, %243 : vector<16x128xf32>
    %245 = arith.mulf %244, %244 : vector<16x128xf32>
    %cst_95 = arith.constant dense<0.000000e+00> : vector<16xf32>
    %246 = vector.multi_reduction <add>, %245, %cst_95 [1] : vector<16x128xf32> to vector<16xf32>
    %247 = vector.shape_cast %246 : vector<16xf32> to vector<16x1xf32>
    %cst_96 = arith.constant 1.280000e+02 : f32
    %248 = vector.broadcast %cst_96 : f32 to vector<16x1xf32>
    %249 = arith.divf %247, %248 : vector<16x1xf32>
    %250 = vector.broadcast %242 : vector<16x1xf32> to vector<16x128xf32>
    %251 = arith.subf %234, %250 : vector<16x128xf32>
    %cst_97 = arith.constant 9.99999974E-6 : f32
    %252 = vector.broadcast %cst_97 : f32 to vector<16x1xf32>
    %253 = arith.addf %249, %252 : vector<16x1xf32>
    %254 = math.rsqrt %253 : vector<16x1xf32>
    %255 = vector.broadcast %254 : vector<16x1xf32> to vector<16x128xf32>
    %256 = arith.mulf %251, %255 : vector<16x128xf32>
    %257 = vector.shape_cast %236 : vector<128xf32> to vector<1x128xf32>
    %258 = vector.broadcast %257 : vector<1x128xf32> to vector<16x128xf32>
    %259 = arith.mulf %256, %258 : vector<16x128xf32>
    %260 = vector.shape_cast %238 : vector<128xf32> to vector<1x128xf32>
    %261 = vector.broadcast %260 : vector<1x128xf32> to vector<16x128xf32>
    %262 = arith.addf %259, %261 : vector<16x128xf32>
    %263 = arith.truncf %262 : vector<16x128xf32> to vector<16x128xbf16>
    %c1_98 = arith.constant 1 : index
    %c0_99 = arith.constant 0 : index
    %c0_100 = arith.constant 0 : index
    %264 = vector.load %arg7[%c1_98, %c0_99, %c0_100] : memref<2x128x256xbf16, #tpu.memory_space<vmem>>, vector<1x128x256xbf16>
    %265 = vector.shape_cast %264 : vector<1x128x256xbf16> to vector<128x256xbf16>
    %cst_101 = arith.constant dense<0.000000e+00> : vector<16x256xf32>
    %266 = tpu.matmul %263, %265, %cst_101 {dimension_numbers = #tpu.dot_dimension_numbers<[1], [0], [0], [1], [0, 0, 1, 1], [], []>} : vector<16x128xbf16>, vector<128x256xbf16>, vector<16x256xf32> -> vector<16x256xf32>
    %c1_102 = arith.constant 1 : index
    %c0_103 = arith.constant 0 : index
    %c0_104 = arith.constant 0 : index
    %267 = vector.load %arg8[%c1_102, %c0_103, %c0_104] : memref<2x1x256xf32, #tpu.memory_space<vmem>>, vector<1x1x256xf32>
    %268 = vector.shape_cast %267 : vector<1x1x256xf32> to vector<256xf32>
    %269 = vector.shape_cast %268 : vector<256xf32> to vector<1x256xf32>
    %270 = vector.broadcast %269 : vector<1x256xf32> to vector<16x256xf32>
    %271 = arith.addf %266, %270 : vector<16x256xf32>
    %cst_105 = arith.constant 5.000000e-01 : f32
    %272 = vector.broadcast %cst_105 : f32 to vector<16x256xf32>
    %273 = arith.mulf %272, %271 : vector<16x256xf32>
    %cst_106 = arith.constant 4.471500e-02 : f32
    %274 = vector.broadcast %cst_106 : f32 to vector<16x256xf32>
    %275 = arith.mulf %274, %271 : vector<16x256xf32>
    %276 = arith.mulf %275, %271 : vector<16x256xf32>
    %277 = arith.mulf %276, %271 : vector<16x256xf32>
    %278 = arith.addf %271, %277 : vector<16x256xf32>
    %cst_107 = arith.constant 0.797884583 : f32
    %279 = vector.broadcast %cst_107 : f32 to vector<16x256xf32>
    %280 = arith.mulf %279, %278 : vector<16x256xf32>
    %281 = math.tanh %280 : vector<16x256xf32>
    %cst_108 = arith.constant 1.000000e+00 : f32
    %282 = vector.broadcast %cst_108 : f32 to vector<16x256xf32>
    %283 = arith.addf %282, %281 : vector<16x256xf32>
    %284 = arith.mulf %273, %283 : vector<16x256xf32>
    %285 = arith.truncf %284 : vector<16x256xf32> to vector<16x256xbf16>
    %c1_109 = arith.constant 1 : index
    %c0_110 = arith.constant 0 : index
    %c0_111 = arith.constant 0 : index
    %286 = vector.load %arg9[%c1_109, %c0_110, %c0_111] : memref<2x256x128xbf16, #tpu.memory_space<vmem>>, vector<1x256x128xbf16>
    %287 = vector.shape_cast %286 : vector<1x256x128xbf16> to vector<256x128xbf16>
    %cst_112 = arith.constant dense<0.000000e+00> : vector<16x128xf32>
    %288 = tpu.matmul %285, %287, %cst_112 {dimension_numbers = #tpu.dot_dimension_numbers<[1], [0], [0], [1], [0, 0, 1, 1], [], []>} : vector<16x256xbf16>, vector<256x128xbf16>, vector<16x128xf32> -> vector<16x128xf32>
    %c1_113 = arith.constant 1 : index
    %c3_114 = arith.constant 3 : index
    %c0_115 = arith.constant 0 : index
    %289 = vector.load %arg6[%c1_113, %c3_114, %c0_115] : memref<2x6x128xf32, #tpu.memory_space<vmem>>, vector<1x1x128xf32>
    %290 = vector.shape_cast %289 : vector<1x1x128xf32> to vector<128xf32>
    %291 = vector.shape_cast %290 : vector<128xf32> to vector<1x128xf32>
    %292 = vector.broadcast %291 : vector<1x128xf32> to vector<16x128xf32>
    %293 = arith.addf %288, %292 : vector<16x128xf32>
    %294 = arith.addf %262, %293 : vector<16x128xf32>
    %c1_116 = arith.constant 1 : index
    %c4_117 = arith.constant 4 : index
    %c0_118 = arith.constant 0 : index
    %295 = vector.load %arg6[%c1_116, %c4_117, %c0_118] : memref<2x6x128xf32, #tpu.memory_space<vmem>>, vector<1x1x128xf32>
    %296 = vector.shape_cast %295 : vector<1x1x128xf32> to vector<128xf32>
    %c1_119 = arith.constant 1 : index
    %c5_120 = arith.constant 5 : index
    %c0_121 = arith.constant 0 : index
    %297 = vector.load %arg6[%c1_119, %c5_120, %c0_121] : memref<2x6x128xf32, #tpu.memory_space<vmem>>, vector<1x1x128xf32>
    %298 = vector.shape_cast %297 : vector<1x1x128xf32> to vector<128xf32>
    %cst_122 = arith.constant dense<0.000000e+00> : vector<16xf32>
    %299 = vector.multi_reduction <add>, %294, %cst_122 [1] : vector<16x128xf32> to vector<16xf32>
    %300 = vector.shape_cast %299 : vector<16xf32> to vector<16x1xf32>
    %cst_123 = arith.constant 1.280000e+02 : f32
    %301 = vector.broadcast %cst_123 : f32 to vector<16x1xf32>
    %302 = arith.divf %300, %301 : vector<16x1xf32>
    %303 = vector.broadcast %302 : vector<16x1xf32> to vector<16x128xf32>
    %304 = arith.subf %294, %303 : vector<16x128xf32>
    %305 = arith.mulf %304, %304 : vector<16x128xf32>
    %cst_124 = arith.constant dense<0.000000e+00> : vector<16xf32>
    %306 = vector.multi_reduction <add>, %305, %cst_124 [1] : vector<16x128xf32> to vector<16xf32>
    %307 = vector.shape_cast %306 : vector<16xf32> to vector<16x1xf32>
    %cst_125 = arith.constant 1.280000e+02 : f32
    %308 = vector.broadcast %cst_125 : f32 to vector<16x1xf32>
    %309 = arith.divf %307, %308 : vector<16x1xf32>
    %310 = vector.broadcast %302 : vector<16x1xf32> to vector<16x128xf32>
    %311 = arith.subf %294, %310 : vector<16x128xf32>
    %cst_126 = arith.constant 9.99999974E-6 : f32
    %312 = vector.broadcast %cst_126 : f32 to vector<16x1xf32>
    %313 = arith.addf %309, %312 : vector<16x1xf32>
    %314 = math.rsqrt %313 : vector<16x1xf32>
    %315 = vector.broadcast %314 : vector<16x1xf32> to vector<16x128xf32>
    %316 = arith.mulf %311, %315 : vector<16x128xf32>
    %317 = vector.shape_cast %296 : vector<128xf32> to vector<1x128xf32>
    %318 = vector.broadcast %317 : vector<1x128xf32> to vector<16x128xf32>
    %319 = arith.mulf %316, %318 : vector<16x128xf32>
    %320 = vector.shape_cast %298 : vector<128xf32> to vector<1x128xf32>
    %321 = vector.broadcast %320 : vector<1x128xf32> to vector<16x128xf32>
    %322 = arith.addf %319, %321 : vector<16x128xf32>
    %323 = vector.shape_cast %322 : vector<16x128xf32> to vector<1x16x128xf32>
    %c0_127 = arith.constant 0 : index
    %c0_128 = arith.constant 0 : index
    %c0_129 = arith.constant 0 : index
    %324 = vector.load %arg10[%c0_127, %c0_128, %c0_129] : memref<1x16x128xf32, #tpu.memory_space<vmem>>, vector<1x16x128xf32>
    tpu.vector_store %arg10[%c0_127, %c0_128, %c0_129], %323 {strides = array<i32>} : memref<1x16x128xf32, #tpu.memory_space<vmem>>, vector<1x16x128xf32>,
    return
  }
  func.func @transform_0(%arg0: i32) -> (i32, i32, i32) {
    %c0_i32 = arith.constant 0 : i32
    %c0_i32_0 = arith.constant 0 : i32
    %c0_i32_1 = arith.constant 0 : i32
    return %arg0, %c0_i32, %c0_i32_0 : i32, i32, i32
  }
  func.func @transform_1(%arg0: i32) -> (i32, i32, i32) {
    %c0_i32 = arith.constant 0 : i32
    %c0_i32_0 = arith.constant 0 : i32
    %c0_i32_1 = arith.constant 0 : i32
    return %arg0, %c0_i32, %c0_i32_0 : i32, i32, i32
  }
  func.func @transform_2(%arg0: i32) -> (i32, i32, i32) {
    %c0_i32 = arith.constant 0 : i32
    %c0_i32_0 = arith.constant 0 : i32
    %c0_i32_1 = arith.constant 0 : i32
    %c0_i32_2 = arith.constant 0 : i32
    return %c0_i32, %c0_i32_0, %c0_i32_1 : i32, i32, i32
  }
  func.func @transform_3(%arg0: i32) -> (i32, i32, i32) {
    %c0_i32 = arith.constant 0 : i32
    %c0_i32_0 = arith.constant 0 : i32
    %c0_i32_1 = arith.constant 0 : i32
    %c0_i32_2 = arith.constant 0 : i32
    return %c0_i32, %c0_i32_0, %c0_i32_1 : i32, i32, i32
  }
  func.func @transform_4(%arg0: i32) -> (i32, i32, i32) {
    %c0_i32 = arith.constant 0 : i32
    %c0_i32_0 = arith.constant 0 : i32
    %c0_i32_1 = arith.constant 0 : i32
    %c0_i32_2 = arith.constant 0 : i32
    return %c0_i32, %c0_i32_0, %c0_i32_1 : i32, i32, i32
  }
  func.func @transform_5(%arg0: i32) -> (i32, i32, i32) {
    %c0_i32 = arith.constant 0 : i32
    %c0_i32_0 = arith.constant 0 : i32
    %c0_i32_1 = arith.constant 0 : i32
    %c0_i32_2 = arith.constant 0 : i32
    return %c0_i32, %c0_i32_0, %c0_i32_1 : i32, i32, i32
  }
  func.func @transform_6(%arg0: i32) -> (i32, i32, i32) {
    %c0_i32 = arith.constant 0 : i32
    %c0_i32_0 = arith.constant 0 : i32
    %c0_i32_1 = arith.constant 0 : i32
    %c0_i32_2 = arith.constant 0 : i32
    return %c0_i32, %c0_i32_0, %c0_i32_1 : i32, i32, i32
  }
  func.func @transform_7(%arg0: i32) -> (i32, i32, i32) {
    %c0_i32 = arith.constant 0 : i32
    %c0_i32_0 = arith.constant 0 : i32
    %c0_i32_1 = arith.constant 0 : i32
    %c0_i32_2 = arith.constant 0 : i32
    return %c0_i32, %c0_i32_0, %c0_i32_1 : i32, i32, i32
  }
  func.func @transform_8(%arg0: i32) -> (i32, i32, i32) {
    %c0_i32 = arith.constant 0 : i32
    %c0_i32_0 = arith.constant 0 : i32
    %c0_i32_1 = arith.constant 0 : i32
    %c0_i32_2 = arith.constant 0 : i32
    return %c0_i32, %c0_i32_0, %c0_i32_1 : i32, i32, i32
  }
  func.func @transform_9(%arg0: i32) -> (i32, i32, i32) {
    %c0_i32 = arith.constant 0 : i32
    %c0_i32_0 = arith.constant 0 : i32
    %c0_i32_1 = arith.constant 0 : i32
    return %arg0, %c0_i32, %c0_i32_0 : i32, i32, i32
  }
}

</mosaic_0001>

<llo_original>
// kernel: roberta_base_layer_forward.1
$region0: #{roberta_base_layer_forward.1}
  #allocation0 [shape = 'u32[]', space=smem, size = 0x4, offset = 0x4, fixed_abs, tag = 'smem constant byte address 0x4 - core index']
  #allocation1 [shape = 'u32[72,128]{1,0:T(1,128)}', space=vmem, size = 0x9000, scoped, tag = 'internal scratch']
  %s0 = inlined_call_operand.vmem [shape: f32[2,16,128], index: 0, kind: input, shape index: {}]
  %s1 = inlined_call_operand.vmem [shape: f32[2,1,16], index: 1, kind: input, shape index: {}]
  %s2 = inlined_call_operand.vmem [shape: bf16[2,128,384], index: 2, kind: input, shape index: {}]
  %s3 = inlined_call_operand.vmem [shape: f32[2,1,384], index: 3, kind: input, shape index: {}]
  %s4 = inlined_call_operand.hbm [shape: bf16[2,128,128], index: 4, kind: input, shape index: {}]
  %s5 = inlined_call_operand.vmem [shape: f32[2,6,128], index: 5, kind: input, shape index: {}]
  %s6 = inlined_call_operand.vmem [shape: bf16[2,128,256], index: 6, kind: input, shape index: {}]
  %s7 = inlined_call_operand.vmem [shape: f32[2,1,256], index: 7, kind: input, shape index: {}]
  %s8 = inlined_call_operand.hbm [shape: bf16[2,256,128], index: 8, kind: input, shape index: {}]
  %s9 = inlined_call_operand.hbm [shape: f32[2,16,128], index: 9, kind: output, shape index: {}]
  %s10 = sld [smem:[#allocation0]]
  $region77: #{roberta_base_layer_forward.1} parent=0
    _
  %s12 = ssub.s32 1, %s10
  %s13 = scalar_select 0, %s12, %s10
  $region1: #{roberta_base_layer_forward.1} parent=0
    #allocation2 [shape = 'u8[65536]{0}', space=vmem, size = 0x10000, scoped, tag = 'input window, operand 4, single buffered']
    #allocation3 [shape = 's32[2]{0}', space=sflag, size = 0x8, scoped, tag = 'scoped memory for roberta_base_layer_forward.1']
    #allocation4 [shape = 's32[2]{0}', space=sflag, size = 0x8, scoped, tag = 'scoped memory for roberta_base_layer_forward.1']
    #allocation5 [shape = 'u8[131072]{0}', space=vmem, size = 0x20000, scoped, tag = 'input window, operand 8, single buffered']
    #allocation6 [shape = 's32[1]{0}', space=sflag, size = 0x4, scoped, tag = 'scoped memory for roberta_base_layer_forward.1']
    #allocation7 [shape = 'u8[16384]{0}', space=vmem, size = 0x4000, scoped, tag = 'output window, operand 0']
    %14 = vsyncpa [#allocation3], 0
    %15 = vsyncpa [#allocation6], 0
    %16 = vsyncpa [#allocation4], 0
    %s17 = scalar_lea.sflag [#allocation4], 1
    %18 = vsyncpa %s17, 0
    loop: start=0, step=1, limit=4
    $region2: #{roberta_base_layer_forward.1} parent=1 // loop_pre_header
      _
    $region3: #{roberta_base_layer_forward.1} parent=1 // loop_header
      %s20 = sphi 0, %s24
      %p21 = scmp.ge.s32.totalorder %s20, 4
      %s30 = sphi 0, %s32
      %s33 = sphi 0, %s30
      %s34 = sphi 0, %s33
      %s50 = sphi 0, %s34
      %s56 = sphi 0, %s58
      %s59 = sphi 0, %s56
      %s60 = sphi 0, %s59
      %s76 = sphi 0, %s60
      %s80 = sphi 0, %s80
      %s82 = sphi 0, %s80
      %s83 = sphi 0, %s82
      %s97 = sphi 0, %s83
      %s101 = sphi 0, %s101
      %s103 = sphi 0, %s101
      %s104 = sphi 0, %s103
      %s118 = sphi 0, %s104
      %s122 = sphi 0, %s122
      %s124 = sphi 0, %s122
      %s125 = sphi 0, %s124
      %s139 = sphi 0, %s125
      %s143 = sphi 0, %s143
      %s145 = sphi 0, %s143
      %s146 = sphi 0, %s145
      %s160 = sphi 0, %s146
      %s164 = sphi 0, %s164
      %s166 = sphi 0, %s164
      %s167 = sphi 0, %s166
      %s181 = sphi 0, %s167
      %s185 = sphi 0, %s185
      %s187 = sphi 0, %s185
      %s188 = sphi 0, %s187
      %s202 = sphi 0, %s188
      %s206 = sphi 0, %s206
      %s208 = sphi 0, %s206
      %s209 = sphi 0, %s208
      %s223 = sphi 0, %s209
      %s229 = sphi 0, %s231
      %s232 = sphi 0, %s229
      %s233 = sphi 0, %s232
      %s249 = sphi 0, %s233
    $region4: #{roberta_base_layer_forward.1} parent=1 // loop_header_branch
      %23 = sbr.rel (%p21) target = $region8
    $region5: #{roberta_base_layer_forward.1} parent=1 // loop_body
      %s25 = ssub.s32 %s20, 1
      %s26 = ssub.s32 %s20, 2
      %s27 = sadd.s32 %s20, 1
      %s28 = ssub.s32 %s20, %s27
      %p29 = scmp.eq.s32.totalorder %s28, 0
      %s31 = sadd.s32 %s30, 1
      %s32 = scalar_select %p29, %s30, %s31
      %p35 = pneg %p29
      %p36 = scmp.eq.s32.totalorder %s20, 1
      %p37 = por %p35, %p36
      %p38 = scmp.ne.s32.totalorder %s30, %s33
      %p39 = scmp.eq.s32.totalorder %s20, 0
      %p40 = por %p38, %p39
      %p41 = scmp.ne.s32.totalorder %s30, %s33
      %p42 = scmp.eq.s32.totalorder %s25, 1
      %p43 = por %p41, %p42
      %p44 = scmp.ne.s32.totalorder %s33, %s34
      %p45 = scmp.eq.s32.totalorder %s25, 0
      %p46 = por %p44, %p45
      %p47 = scmp.ne.s32.totalorder %s33, %s34
      %p48 = scmp.eq.s32.totalorder %s26, 1
      %p49 = por %p47, %p48
      %p51 = scmp.ne.s32.totalorder %s34, %s50
      %p52 = scmp.eq.s32.totalorder %s26, 0
      %p53 = por %p51, %p52
      %s54 = ssub.s32 %s20, %s27
      %p55 = scmp.eq.s32.totalorder %s54, 0
      %s57 = sadd.s32 %s56, 1
      %s58 = scalar_select %p55, %s56, %s57
      %p61 = pneg %p55
      %p62 = scmp.eq.s32.totalorder %s20, 1
      %p63 = por %p61, %p62
      %p64 = scmp.ne.s32.totalorder %s56, %s59
      %p65 = scmp.eq.s32.totalorder %s20, 0
      %p66 = por %p64, %p65
      %p67 = scmp.ne.s32.totalorder %s56, %s59
      %p68 = scmp.eq.s32.totalorder %s25, 1
      %p69 = por %p67, %p68
      %p70 = scmp.ne.s32.totalorder %s59, %s60
      %p71 = scmp.eq.s32.totalorder %s25, 0
      %p72 = por %p70, %p71
      %p73 = scmp.ne.s32.totalorder %s59, %s60
      %p74 = scmp.eq.s32.totalorder %s26, 1
      %p75 = por %p73, %p74
      %p77 = scmp.ne.s32.totalorder %s60, %s76
      %p78 = scmp.eq.s32.totalorder %s26, 0
      %p79 = por %p77, %p78
      %s81 = sadd.s32 %s80, 1
      %p84 = scmp.eq.s32.totalorder %s20, 1
      %p85 = scmp.ne.s32.totalorder %s80, %s82
      %p86 = scmp.eq.s32.totalorder %s20, 0
      %p87 = por %p85, %p86
      %p88 = scmp.ne.s32.totalorder %s80, %s82
      %p89 = scmp.eq.s32.totalorder %s25, 1
      %p90 = por %p88, %p89
      %p91 = scmp.ne.s32.totalorder %s82, %s83
      %p92 = scmp.eq.s32.totalorder %s25, 0
      %p93 = por %p91, %p92
      %p94 = scmp.ne.s32.totalorder %s82, %s83
      %p95 = scmp.eq.s32.totalorder %s26, 1
      %p96 = por %p94, %p95
      %p98 = scmp.ne.s32.totalorder %s83, %s97
      %p99 = scmp.eq.s32.totalorder %s26, 0
      %p100 = por %p98, %p99
      %s102 = sadd.s32 %s101, 1
      %p105 = scmp.eq.s32.totalorder %s20, 1
      %p106 = scmp.ne.s32.totalorder %s101, %s103
      %p107 = scmp.eq.s32.totalorder %s20, 0
      %p108 = por %p106, %p107
      %p109 = scmp.ne.s32.totalorder %s101, %s103
      %p110 = scmp.eq.s32.totalorder %s25, 1
      %p111 = por %p109, %p110
      %p112 = scmp.ne.s32.totalorder %s103, %s104
      %p113 = scmp.eq.s32.totalorder %s25, 0
      %p114 = por %p112, %p113
      %p115 = scmp.ne.s32.totalorder %s103, %s104
      %p116 = scmp.eq.s32.totalorder %s26, 1
      %p117 = por %p115, %p116
      %p119 = scmp.ne.s32.totalorder %s104, %s118
      %p120 = scmp.eq.s32.totalorder %s26, 0
      %p121 = por %p119, %p120
      %s123 = sadd.s32 %s122, 1
      %p126 = scmp.eq.s32.totalorder %s20, 1
      %p127 = scmp.ne.s32.totalorder %s122, %s124
      %p128 = scmp.eq.s32.totalorder %s20, 0
      %p129 = por %p127, %p128
      %p130 = scmp.ne.s32.totalorder %s122, %s124
      %p131 = scmp.eq.s32.totalorder %s25, 1
      %p132 = por %p130, %p131
      %p133 = scmp.ne.s32.totalorder %s124, %s125
      %p134 = scmp.eq.s32.totalorder %s25, 0
      %p135 = por %p133, %p134
      %p136 = scmp.ne.s32.totalorder %s124, %s125
      %p137 = scmp.eq.s32.totalorder %s26, 1
      %p138 = por %p136, %p137
      %p140 = scmp.ne.s32.totalorder %s125, %s139
      %p141 = scmp.eq.s32.totalorder %s26, 0
      %p142 = por %p140, %p141
      %s144 = sadd.s32 %s143, 1
      %p147 = scmp.eq.s32.totalorder %s20, 1
      %p148 = scmp.ne.s32.totalorder %s143, %s145
      %p149 = scmp.eq.s32.totalorder %s20, 0
      %p150 = por %p148, %p149
      %p151 = scmp.ne.s32.totalorder %s143, %s145
      %p152 = scmp.eq.s32.totalorder %s25, 1
      %p153 = por %p151, %p152
      %p154 = scmp.ne.s32.totalorder %s145, %s146
      %p155 = scmp.eq.s32.totalorder %s25, 0
      %p156 = por %p154, %p155
      %p157 = scmp.ne.s32.totalorder %s145, %s146
      %p158 = scmp.eq.s32.totalorder %s26, 1
      %p159 = por %p157, %p158
      %p161 = scmp.ne.s32.totalorder %s146, %s160
      %p162 = scmp.eq.s32.totalorder %s26, 0
      %p163 = por %p161, %p162
      %s165 = sadd.s32 %s164, 1
      %p168 = scmp.eq.s32.totalorder %s20, 1
      %p169 = scmp.ne.s32.totalorder %s164, %s166
      %p170 = scmp.eq.s32.totalorder %s20, 0
      %p171 = por %p169, %p170
      %p172 = scmp.ne.s32.totalorder %s164, %s166
      %p173 = scmp.eq.s32.totalorder %s25, 1
      %p174 = por %p172, %p173
      %p175 = scmp.ne.s32.totalorder %s166, %s167
      %p176 = scmp.eq.s32.totalorder %s25, 0
      %p177 = por %p175, %p176
      %p178 = scmp.ne.s32.totalorder %s166, %s167
      %p179 = scmp.eq.s32.totalorder %s26, 1
      %p180 = por %p178, %p179
      %p182 = scmp.ne.s32.totalorder %s167, %s181
      %p183 = scmp.eq.s32.totalorder %s26, 0
      %p184 = por %p182, %p183
      %s186 = sadd.s32 %s185, 1
      %p189 = scmp.eq.s32.totalorder %s20, 1
      %p190 = scmp.ne.s32.totalorder %s185, %s187
      %p191 = scmp.eq.s32.totalorder %s20, 0
      %p192 = por %p190, %p191
      %p193 = scmp.ne.s32.totalorder %s185, %s187
      %p194 = scmp.eq.s32.totalorder %s25, 1
      %p195 = por %p193, %p194
      %p196 = scmp.ne.s32.totalorder %s187, %s188
      %p197 = scmp.eq.s32.totalorder %s25, 0
      %p198 = por %p196, %p197
      %p199 = scmp.ne.s32.totalorder %s187, %s188
      %p200 = scmp.eq.s32.totalorder %s26, 1
      %p201 = por %p199, %p200
      %p203 = scmp.ne.s32.totalorder %s188, %s202
      %p204 = scmp.eq.s32.totalorder %s26, 0
      %p205 = por %p203, %p204
      %s207 = sadd.s32 %s206, 1
      %p210 = scmp.eq.s32.totalorder %s20, 1
      %p211 = scmp.ne.s32.totalorder %s206, %s208
      %p212 = scmp.eq.s32.totalorder %s20, 0
      %p213 = por %p211, %p212
      %p214 = scmp.ne.s32.totalorder %s206, %s208
      %p215 = scmp.eq.s32.totalorder %s25, 1
      %p216 = por %p214, %p215
      %p217 = scmp.ne.s32.totalorder %s208, %s209
      %p218 = scmp.eq.s32.totalorder %s25, 0
      %p219 = por %p217, %p218
      %p220 = scmp.ne.s32.totalorder %s208, %s209
      %p221 = scmp.eq.s32.totalorder %s26, 1
      %p222 = por %p220, %p221
      %p224 = scmp.ne.s32.totalorder %s209, %s223
      %p225 = scmp.eq.s32.totalorder %s26, 0
      %p226 = por %p224, %p225
      %s227 = ssub.s32 %s20, %s27
      %p228 = scmp.eq.s32.totalorder %s227, 0
      %s230 = sadd.s32 %s229, 1
      %s231 = scalar_select %p228, %s229, %s230
      %p234 = pneg %p228
      %p235 = scmp.eq.s32.totalorder %s20, 1
      %p236 = por %p234, %p235
      %p237 = scmp.ne.s32.totalorder %s229, %s232
      %p238 = scmp.eq.s32.totalorder %s20, 0
      %p239 = por %p237, %p238
      %p240 = scmp.ne.s32.totalorder %s229, %s232
      %p241 = scmp.eq.s32.totalorder %s25, 1
      %p242 = por %p240, %p241
      %p243 = scmp.ne.s32.totalorder %s232, %s233
      %p244 = scmp.eq.s32.totalorder %s25, 0
      %p245 = por %p243, %p244
      %p246 = scmp.ne.s32.totalorder %s232, %s233
      %p247 = scmp.eq.s32.totalorder %s26, 1
      %p248 = por %p246, %p247
      %p250 = scmp.ne.s32.totalorder %s233, %s249
      %p251 = scmp.eq.s32.totalorder %s26, 0
      %p252 = por %p250, %p251
      %p253 = scmp.le.s32.totalorder 1, %s20
      %p254 = scmp.lt.s32.totalorder %s20, 3
      %p255 = pnand %p253, %p254
      %p256 = pneg %p255
      // Predicated region
      $region9: #{roberta_base_layer_forward.1} parent=5 // pred_check
        _
      $region10: #{roberta_base_layer_forward.1} parent=5 // pred_check_branch
        %258 = sbr.rel (%p255) target = $region12
      $region11: #{roberta_base_layer_forward.1} parent=5 // pred_region
        %s259 = ssub.s32 %s20, 1
        // Predicated region
        $region13: #{roberta_base_layer_forward.1} parent=11 // pred_check
          %p260 = pneg %p93
        $region14: #{roberta_base_layer_forward.1} parent=11 // pred_check_branch
          %262 = sbr.rel (%p260) target = $region16
        $region15: #{roberta_base_layer_forward.1} parent=11 // pred_region
          _
        $region16: #{roberta_base_layer_forward.1} parent=11 // pred_fallthru
          _
        // Predicated region
        $region17: #{roberta_base_layer_forward.1} parent=11 // pred_check
          %p263 = pneg %p114
        $region18: #{roberta_base_layer_forward.1} parent=11 // pred_check_branch
          %265 = sbr.rel (%p263) target = $region20
        $region19: #{roberta_base_layer_forward.1} parent=11 // pred_region
          _
        $region20: #{roberta_base_layer_forward.1} parent=11 // pred_fallthru
          _
        // Predicated region
        $region21: #{roberta_base_layer_forward.1} parent=11 // pred_check
          %p266 = pneg %p135
        $region22: #{roberta_base_layer_forward.1} parent=11 // pred_check_branch
          %268 = sbr.rel (%p266) target = $region24
        $region23: #{roberta_base_layer_forward.1} parent=11 // pred_region
          %270 = vsyncadd [#allocation3], 0
          %s271 = sshll.u32 %s4, 4
          %s272 = int_to_ptr.hbm [resolvable:$true] %s271
          %s273 = sshll.u32 [#allocation2], 4
          %s274 = int_to_ptr.vmem [resolvable:$true] %s273
          %279 = dma.hbm_to_vmem [thread:$0]  %s272, 2048, %s274, [#allocation3], 64, 64, 4
        $region24: #{roberta_base_layer_forward.1} parent=11 // pred_fallthru
          _
        // Predicated region
        $region25: #{roberta_base_layer_forward.1} parent=11 // pred_check
          %p280 = pneg %p156
        $region26: #{roberta_base_layer_forward.1} parent=11 // pred_check_branch
          %282 = sbr.rel (%p280) target = $region28
        $region27: #{roberta_base_layer_forward.1} parent=11 // pred_region
          _
        $region28: #{roberta_base_layer_forward.1} parent=11 // pred_fallthru
          _
        // Predicated region
        $region29: #{roberta_base_layer_forward.1} parent=11 // pred_check
          %p283 = pneg %p177
        $region30: #{roberta_base_layer_forward.1} parent=11 // pred_check_branch
          %285 = sbr.rel (%p283) target = $region32
        $region31: #{roberta_base_layer_forward.1} parent=11 // pred_region
          _
        $region32: #{roberta_base_layer_forward.1} parent=11 // pred_fallthru
          _
        // Predicated region
        $region33: #{roberta_base_layer_forward.1} parent=11 // pred_check
          %p286 = pneg %p198
        $region34: #{roberta_base_layer_forward.1} parent=11 // pred_check_branch
          %288 = sbr.rel (%p286) target = $region36
        $region35: #{roberta_base_layer_forward.1} parent=11 // pred_region
          _
        $region36: #{roberta_base_layer_forward.1} parent=11 // pred_fallthru
          _
        // Predicated region
        $region37: #{roberta_base_layer_forward.1} parent=11 // pred_check
          %p289 = pneg %p219
        $region38: #{roberta_base_layer_forward.1} parent=11 // pred_check_branch
          %291 = sbr.rel (%p289) target = $region40
        $region39: #{roberta_base_layer_forward.1} parent=11 // pred_region
          %293 = vsyncadd [#allocation6], 0
          %s294 = sshll.u32 %s8, 4
          %s295 = int_to_ptr.hbm [resolvable:$true] %s294
          %s296 = sshll.u32 [#allocation5], 4
          %s297 = int_to_ptr.vmem [resolvable:$true] %s296
          %302 = dma.hbm_to_vmem [thread:$0]  %s295, 4096, %s297, [#allocation6], 64, 64, 4
        $region40: #{roberta_base_layer_forward.1} parent=11 // pred_fallthru
          _
      $region12: #{roberta_base_layer_forward.1} parent=5 // pred_fallthru
        _
      %p303 = scmp.lt.s32.totalorder %s20, 2
      // Predicated region
      $region41: #{roberta_base_layer_forward.1} parent=5 // pred_check
        %p304 = pneg %p303
      $region42: #{roberta_base_layer_forward.1} parent=5 // pred_check_branch
        %306 = sbr.rel (%p304) target = $region44
      $region43: #{roberta_base_layer_forward.1} parent=5 // pred_region
        // Predicated region
        $region45: #{roberta_base_layer_forward.1} parent=43 // pred_check
          %p307 = pneg %p40
        $region46: #{roberta_base_layer_forward.1} parent=43 // pred_check_branch
          %309 = sbr.rel (%p307) target = $region48
        $region47: #{roberta_base_layer_forward.1} parent=43 // pred_region
          %p310 = scmp.lt.s32.totalorder %s20, 1
          %s311 = scalar_select %p310, %s20, 1
          %s312 = smul.addr %s311, 2
          %s313 = smul.addr %s312, 8
          %s314 = scalar_lea.vmem %s0, %s313
        $region48: #{roberta_base_layer_forward.1} parent=43 // pred_fallthru
          _
        // Predicated region
        $region49: #{roberta_base_layer_forward.1} parent=43 // pred_check
          %p315 = pneg %p66
        $region50: #{roberta_base_layer_forward.1} parent=43 // pred_check_branch
          %317 = sbr.rel (%p315) target = $region52
        $region51: #{roberta_base_layer_forward.1} parent=43 // pred_region
          %p318 = scmp.lt.s32.totalorder %s20, 1
          %s319 = scalar_select %p318, %s20, 1
          %s320 = scalar_lea.vmem %s1, %s319
        $region52: #{roberta_base_layer_forward.1} parent=43 // pred_fallthru
          _
      $region44: #{roberta_base_layer_forward.1} parent=5 // pred_fallthru
        _
      %p321 = scmp.le.s32.totalorder 1, %s20
      %p322 = scmp.lt.s32.totalorder %s20, 3
      %p323 = pnand %p321, %p322
      %p324 = pneg %p323
      // Predicated region
      $region53: #{roberta_base_layer_forward.1} parent=5 // pred_check
        _
      $region54: #{roberta_base_layer_forward.1} parent=5 // pred_check_branch
        %326 = sbr.rel (%p323) target = $region56
      $region55: #{roberta_base_layer_forward.1} parent=5 // pred_region
        %s327 = ssub.s32 %s20, 1
        // Predicated region
        $region57: #{roberta_base_layer_forward.1} parent=55 // pred_check
          %p328 = pneg %p135
        $region58: #{roberta_base_layer_forward.1} parent=55 // pred_check_branch
          %330 = sbr.rel (%p328) target = $region60
        $region59: #{roberta_base_layer_forward.1} parent=55 // pred_region
          %332 = dma.done [#allocation3], 2048
        $region60: #{roberta_base_layer_forward.1} parent=55 // pred_fallthru
          _
        // Predicated region
        $region61: #{roberta_base_layer_forward.1} parent=55 // pred_check
          %p333 = pneg %p219
        $region62: #{roberta_base_layer_forward.1} parent=55 // pred_check_branch
          %335 = sbr.rel (%p333) target = $region64
        $region63: #{roberta_base_layer_forward.1} parent=55 // pred_region
          %337 = dma.done [#allocation6], 4096
        $region64: #{roberta_base_layer_forward.1} parent=55 // pred_fallthru
          _
        %p338 = scmp.lt.s32.totalorder %s25, 1
        %s339 = scalar_select %p338, %s25, 1
        %s340 = smul.addr %s339, 2
        %s341 = smul.addr %s340, 8
        %s342 = scalar_lea.vmem %s0, %s341
        %p343 = pneg %p46
        %p344 = pneg %p43
        %p345 = scmp.lt.s32.totalorder %s25, 1
        %s346 = scalar_select %p345, %s25, 1
        %s347 = scalar_lea.vmem %s1, %s346
        %p348 = pneg %p72
        %p349 = pneg %p69
        %p350 = pneg %p93
        %p351 = pneg %p90
        %p352 = pneg %p114
        %p353 = pneg %p111
        %p354 = pneg %p135
        %p355 = pneg %p132
        %p356 = pneg %p156
        %p357 = pneg %p153
        %p358 = pneg %p177
        %p359 = pneg %p174
        %p360 = pneg %p198
        %p361 = pneg %p195
        %p362 = pneg %p219
        %p363 = pneg %p216
        %p364 = pneg %p245
        %p365 = pneg %p242
        %s366 = sand.u32 %s232, 1
        %s367 = scalar_lea.sflag [#allocation4], %s366
        %s368 = sand.u32 %s232, 1
        %s369 = smul.addr %s368, 16
        %s370 = scalar_lea.vmem [#allocation7], %s369
        %p371 = scmp.lt.s32.totalorder %s25, 1
        %s372 = scalar_select %p371, %s25, 1
        %s373 = smul.addr %s372, 2
        %s374 = smul.addr %s373, 8
        %s375 = scalar_lea.vmem %s0, %s374
        %p376 = scmp.lt.s32.totalorder %s25, 1
        %s377 = scalar_select %p376, %s25, 1
        %s378 = scalar_lea.vmem %s1, %s377
        %v380 = vld [vmem:[%s378] sm:$0x1]
        %v381 = vld [vmem:[%s375] sm:$0xff]
        %v382 = vld [vmem:[%s375 + $0x8] sm:$0xff]
        %v383 = vpack.c.bf16 %v382, %v381
        %v384 = vld [vmem:[%s2] sm:$0xff]
        %v385 = vld [vmem:[%s2 + $0x8] sm:$0xf]
        %v386 = vld [vmem:[%s2 + $0xc] sm:$0xff]
        %v387 = vld [vmem:[%s2 + $0x14] sm:$0xf]
        %v388 = vld [vmem:[%s2 + $0x18] sm:$0xff]
        %v389 = vld [vmem:[%s2 + $0x20] sm:$0xf]
        %v390 = vld [vmem:[%s2 + $0x24] sm:$0xff]
        %v391 = vld [vmem:[%s2 + $0x2c] sm:$0xf]
        %v392 = vld [vmem:[%s2 + $0x30] sm:$0xff]
        %v393 = vld [vmem:[%s2 + $0x38] sm:$0xf]
        %v394 = vld [vmem:[%s2 + $0x3c] sm:$0xff]
        %v395 = vld [vmem:[%s2 + $0x44] sm:$0xf]
        %v396 = vld [vmem:[%s2 + $0x48] sm:$0xff]
        %v397 = vld [vmem:[%s2 + $0x50] sm:$0xf]
        %v398 = vld [vmem:[%s2 + $0x54] sm:$0xff]
        %v399 = vld [vmem:[%s2 + $0x5c] sm:$0xf]
        %v400 = vld [vmem:[%s2 + $0x60] sm:$0xff]
        %v401 = vld [vmem:[%s2 + $0x68] sm:$0xf]
        %v402 = vld [vmem:[%s2 + $0x6c] sm:$0xff]
        %v403 = vld [vmem:[%s2 + $0x74] sm:$0xf]
        %v404 = vld [vmem:[%s2 + $0x78] sm:$0xff]
        %v405 = vld [vmem:[%s2 + $0x80] sm:$0xf]
        %v406 = vld [vmem:[%s2 + $0x84] sm:$0xff]
        %v407 = vld [vmem:[%s2 + $0x8c] sm:$0xf]
        %v408 = vld [vmem:[%s2 + $0x90] sm:$0xff]
        %v409 = vld [vmem:[%s2 + $0x98] sm:$0xf]
        %v410 = vld [vmem:[%s2 + $0x9c] sm:$0xff]
        %v411 = vld [vmem:[%s2 + $0xa4] sm:$0xf]
        %v412 = vld [vmem:[%s2 + $0xa8] sm:$0xff]
        %v413 = vld [vmem:[%s2 + $0xb0] sm:$0xf]
        %v414 = vld [vmem:[%s2 + $0xb4] sm:$0xff]
        %v415 = vld [vmem:[%s2 + $0xbc] sm:$0xf]
        %v416 = vld [vmem:[%s3] sm:$0x7]
        %v418 = vperm.slane %v416, 0
        %v419 = vperm.slane %v416, 1
        %v420 = vperm.slane %v416, 2
        %v456 = vunpack.c.l.b16 %v384
        %v457 = vunpack.c.h.b16 %v384
        %v458 = vunpack.c.l.b16 %v385
        %v459 = vunpack.c.l.b16 %v386
        %v460 = vunpack.c.h.b16 %v386
        %v461 = vunpack.c.l.b16 %v387
        %v462 = vunpack.c.l.b16 %v388
        %v463 = vunpack.c.h.b16 %v388
        %v464 = vunpack.c.l.b16 %v389
        %v465 = vunpack.c.l.b16 %v390
        %v466 = vunpack.c.h.b16 %v390
        %v467 = vunpack.c.l.b16 %v391
        %v468 = vunpack.c.l.b16 %v392
        %v469 = vunpack.c.h.b16 %v392
        %v470 = vunpack.c.l.b16 %v393
        %v471 = vunpack.c.l.b16 %v394
        %v472 = vunpack.c.h.b16 %v394
        %v473 = vunpack.c.l.b16 %v395
        %v474 = vunpack.c.l.b16 %v396
        %v475 = vunpack.c.h.b16 %v396
        %v476 = vunpack.c.l.b16 %v397
        %v477 = vunpack.c.l.b16 %v398
        %v478 = vunpack.c.h.b16 %v398
        %v479 = vunpack.c.l.b16 %v399
        %v480 = vunpack.c.l.b16 %v400
        %v481 = vunpack.c.h.b16 %v400
        %v482 = vunpack.c.l.b16 %v401
        %v483 = vunpack.c.l.b16 %v402
        %v484 = vunpack.c.h.b16 %v402
        %v485 = vunpack.c.l.b16 %v403
        %v486 = vunpack.c.l.b16 %v404
        %v487 = vunpack.c.h.b16 %v404
        %v488 = vunpack.c.l.b16 %v405
        %v489 = vunpack.c.l.b16 %v406
        %v490 = vunpack.c.h.b16 %v406
        %v491 = vunpack.c.l.b16 %v407
        %v492 = vunpack.c.l.b16 %v408
        %v493 = vunpack.c.h.b16 %v408
        %v494 = vunpack.c.l.b16 %v409
        %v495 = vunpack.c.l.b16 %v410
        %v496 = vunpack.c.h.b16 %v410
        %v497 = vunpack.c.l.b16 %v411
        %v498 = vunpack.c.l.b16 %v412
        %v499 = vunpack.c.h.b16 %v412
        %v500 = vunpack.c.l.b16 %v413
        %v501 = vunpack.c.l.b16 %v414
        %v502 = vunpack.c.h.b16 %v414
        %v503 = vunpack.c.l.b16 %v415
        %v504 = vpack.c.b16 %v459, %v456
        %v505 = vpack.c.b16 %v460, %v457
        %v506 = vpack.c.b16 %v461, %v458
        %v507 = vpack.c.b16 %v465, %v462
        %v508 = vpack.c.b16 %v466, %v463
        %v509 = vpack.c.b16 %v467, %v464
        %v510 = vpack.c.b16 %v471, %v468
        %v511 = vpack.c.b16 %v472, %v469
        %v512 = vpack.c.b16 %v473, %v470
        %v513 = vpack.c.b16 %v477, %v474
        %v514 = vpack.c.b16 %v478, %v475
        %v515 = vpack.c.b16 %v479, %v476
        %v516 = vpack.c.b16 %v483, %v480
        %v517 = vpack.c.b16 %v484, %v481
        %v518 = vpack.c.b16 %v485, %v482
        %v519 = vpack.c.b16 %v489, %v486
        %v520 = vpack.c.b16 %v490, %v487
        %v521 = vpack.c.b16 %v491, %v488
        %v522 = vpack.c.b16 %v495, %v492
        %v523 = vpack.c.b16 %v496, %v493
        %v524 = vpack.c.b16 %v497, %v494
        %v525 = vpack.c.b16 %v501, %v498
        %v526 = vpack.c.b16 %v502, %v499
        %v527 = vpack.c.b16 %v503, %v500
        %552 = vmatpush.bf16.msra.mxu0 %v525
        %553 = vmatpush.bf16.msra.mxu0 %v522
        %554 = vmatpush.bf16.msra.mxu0 %v519
        %555 = vmatpush.bf16.msra.mxu0 %v516
        %556 = vmatpush.bf16.msra.mxu0 %v513
        %557 = vmatpush.bf16.msra.mxu0 %v510
        %558 = vmatpush.bf16.msra.mxu0 %v507
        %559 = vmatpush.bf16.msra.mxu0 %v504
        %560 = vmatmul.bf16.gmra.mxu0 %v383
        %v561 = vpop.f32.mrf.mxu0
        %v562 = vadd.f32 %v418, %v561
        %v563 = vpop.f32.mrf.mxu0
        %v564 = vadd.f32 %v418, %v563
        %565 = vdwg.mxu0
        %566 = vmatpush.bf16.msra.mxu0 %v526
        %567 = vmatpush.bf16.msra.mxu0 %v523
        %568 = vmatpush.bf16.msra.mxu0 %v520
        %569 = vmatpush.bf16.msra.mxu0 %v517
        %570 = vmatpush.bf16.msra.mxu0 %v514
        %571 = vmatpush.bf16.msra.mxu0 %v511
        %572 = vmatpush.bf16.msra.mxu0 %v508
        %573 = vmatpush.bf16.msra.mxu0 %v505
        %574 = vmatmul.bf16.gmra.mxu0 %v383
        %v575 = vpop.f32.mrf.mxu0
        %v576 = vadd.f32 %v419, %v575
        %v577 = vpop.f32.mrf.mxu0
        %v578 = vadd.f32 %v419, %v577
        %579 = vdwg.mxu0
        %580 = vmatpush.bf16.msra.mxu0 %v527
        %581 = vmatpush.bf16.msra.mxu0 %v524
        %582 = vmatpush.bf16.msra.mxu0 %v521
        %583 = vmatpush.bf16.msra.mxu0 %v518
        %584 = vmatpush.bf16.msra.mxu0 %v515
        %585 = vmatpush.bf16.msra.mxu0 %v512
        %586 = vmatpush.bf16.msra.mxu0 %v509
        %587 = vmatpush.bf16.msra.mxu0 %v506
        %588 = vmatmul.bf16.gmra.mxu0 %v383
        %v589 = vpop.f32.mrf.mxu0
        %v590 = vadd.f32 %v420, %v589
        %v591 = vpop.f32.mrf.mxu0
        %v592 = vadd.f32 %v420, %v591
        %593 = vdwg.mxu0
        %v594 = vpack.c.bf16 %v562, %v562
        %v595 = vpack.c.bf16 %v564, %v564
        %v596 = vpack.c.bf16 %v576, %v576
        %v597 = vpack.c.bf16 %v578, %v578
        %v598 = vpack.c.bf16 %v590, %v590
        %v599 = vpack.c.bf16 %v592, %v592
        %v602 = vunpack.c.l.b16 %v594
        %v603 = vunpack.c.l.b16 %v595
        %v604 = vpack.c.b16 %v603, %v602
        %v607 = vunpack.c.l.b16 %v596
        %v608 = vunpack.c.l.b16 %v597
        %v609 = vpack.c.b16 %v608, %v607
        %vm610 = vcmask 261120
        %v612 = vsel %vm610, %v604, 0
        %v615 = vsel %vm610, %v609, 0
        %617 = vmatpush.bf16.xpose.msra.mxu0 0
        %618 = vmatpush.bf16.xpose.msra.mxu0 0
        %619 = vmatpush.bf16.xpose.msra.mxu0 0
        %620 = vmatpush.bf16.xpose.msra.mxu0 0
        %621 = vmatpush.bf16.xpose.msra.mxu0 0
        %622 = vmatpush.bf16.xpose.msra.mxu0 0
        %623 = vmatpush.bf16.xpose.msra.mxu0 0
        %624 = vmatpush.bf16.xpose.msra.mxu0 %v615
        %625 = vmatmul.bf16.gmra.mxu0 %v612
        %v626 = vpop.f32.mrf.mxu0
        %v627 = vadd.f32 0.0, %v626
        %v628 = vpop.f32.mrf.mxu0
        %v629 = vadd.f32 0.0, %v628
        %630 = vdwg.mxu0
        %631 = vrot.lane.b32.xlu0 %v604, 96
        %v632 = vpop.permute.xlu0 %631
        %633 = vrot.lane.b32.xlu0 %v609, 96
        %v634 = vpop.permute.xlu0 %633
        %v636 = vsel %vm610, %v632, 0
        %v639 = vsel %vm610, %v634, 0
        %641 = vmatpush.bf16.xpose.msra.mxu0 0
        %642 = vmatpush.bf16.xpose.msra.mxu0 0
        %643 = vmatpush.bf16.xpose.msra.mxu0 0
        %644 = vmatpush.bf16.xpose.msra.mxu0 0
        %645 = vmatpush.bf16.xpose.msra.mxu0 0
        %646 = vmatpush.bf16.xpose.msra.mxu0 0
        %647 = vmatpush.bf16.xpose.msra.mxu0 0
        %648 = vmatpush.bf16.xpose.msra.mxu0 %v639
        %649 = vmatmul.bf16.gmra.mxu0 %v636
        %v650 = vpop.f32.mrf.mxu0
        %v651 = vadd.f32 0.0, %v650
        %v652 = vpop.f32.mrf.mxu0
        %v653 = vadd.f32 0.0, %v652
        %654 = vdwg.mxu0
        %655 = vrot.lane.b32.xlu0 %v604, 64
        %v656 = vpop.permute.xlu0 %655
        %657 = vrot.lane.b32.xlu0 %v609, 64
        %v658 = vpop.permute.xlu0 %657
        %v660 = vsel %vm610, %v656, 0
        %v663 = vsel %vm610, %v658, 0
        %665 = vmatpush.bf16.xpose.msra.mxu0 0
        %666 = vmatpush.bf16.xpose.msra.mxu0 0
        %667 = vmatpush.bf16.xpose.msra.mxu0 0
        %668 = vmatpush.bf16.xpose.msra.mxu0 0
        %669 = vmatpush.bf16.xpose.msra.mxu0 0
        %670 = vmatpush.bf16.xpose.msra.mxu0 0
        %671 = vmatpush.bf16.xpose.msra.mxu0 0
        %672 = vmatpush.bf16.xpose.msra.mxu0 %v663
        %673 = vmatmul.bf16.gmra.mxu0 %v660
        %v674 = vpop.f32.mrf.mxu0
        %v675 = vadd.f32 0.0, %v674
        %v676 = vpop.f32.mrf.mxu0
        %v677 = vadd.f32 0.0, %v676
        %678 = vdwg.mxu0
        %679 = vrot.lane.b32.xlu0 %v604, 32
        %v680 = vpop.permute.xlu0 %679
        %681 = vrot.lane.b32.xlu0 %v609, 32
        %v682 = vpop.permute.xlu0 %681
        %v684 = vsel %vm610, %v680, 0
        %v687 = vsel %vm610, %v682, 0
        %689 = vmatpush.bf16.xpose.msra.mxu0 0
        %690 = vmatpush.bf16.xpose.msra.mxu0 0
        %691 = vmatpush.bf16.xpose.msra.mxu0 0
        %692 = vmatpush.bf16.xpose.msra.mxu0 0
        %693 = vmatpush.bf16.xpose.msra.mxu0 0
        %694 = vmatpush.bf16.xpose.msra.mxu0 0
        %695 = vmatpush.bf16.xpose.msra.mxu0 0
        %696 = vmatpush.bf16.xpose.msra.mxu0 %v687
        %697 = vmatmul.bf16.gmra.mxu0 %v684
        %v698 = vpop.f32.mrf.mxu0
        %v699 = vadd.f32 0.0, %v698
        %v700 = vpop.f32.mrf.mxu0
        %v701 = vadd.f32 0.0, %v700
        %702 = vdwg.mxu0
        %v704 = vperm.slane %v380, 0
        %v706 = vadd.f32 %v627, %v704
        %v707 = vadd.f32 %v629, %v704
        %v708 = vadd.f32 %v651, %v704
        %v709 = vadd.f32 %v653, %v704
        %v710 = vadd.f32 %v675, %v704
        %v711 = vadd.f32 %v677, %v704
        %v712 = vadd.f32 %v699, %v704
        %v713 = vadd.f32 %v701, %v704
        %vm714 = vcmask 130048
        %v715 = vsel %vm714, %v706, -inf
        %716 = vmax.xlane.f32.xlu0 %v715
        %v717 = vpop.xlane.xlu0 %716
        %v718 = vsel %vm714, %v707, -inf
        %719 = vmax.xlane.f32.xlu0 %v718
        %v720 = vpop.xlane.xlu0 %719
        %v721 = vsel %vm714, %v708, -inf
        %722 = vmax.xlane.f32.xlu0 %v721
        %v723 = vpop.xlane.xlu0 %722
        %v724 = vsel %vm714, %v709, -inf
        %725 = vmax.xlane.f32.xlu0 %v724
        %v726 = vpop.xlane.xlu0 %725
        %v727 = vsel %vm714, %v710, -inf
        %728 = vmax.xlane.f32.xlu0 %v727
        %v729 = vpop.xlane.xlu0 %728
        %v730 = vsel %vm714, %v711, -inf
        %731 = vmax.xlane.f32.xlu0 %v730
        %v732 = vpop.xlane.xlu0 %731
        %v733 = vsel %vm714, %v712, -inf
        %734 = vmax.xlane.f32.xlu0 %v733
        %v735 = vpop.xlane.xlu0 %734
        %v736 = vsel %vm714, %v713, -inf
        %737 = vmax.xlane.f32.xlu0 %v736
        %v738 = vpop.xlane.xlu0 %737
        %v739 = vsub.f32 %v706, %v717
        %v740 = vsub.f32 %v707, %v720
        %v741 = vsub.f32 %v708, %v723
        %v742 = vsub.f32 %v709, %v726
        %v743 = vsub.f32 %v710, %v729
        %v744 = vsub.f32 %v711, %v732
        %v745 = vsub.f32 %v712, %v735
        %v746 = vsub.f32 %v713, %v738
        %v747 = vmul.f32 %v739, 1.442695
        %v748 = vpow.pop %v747
        %v749 = vmul.f32 %v740, 1.442695
        %v750 = vpow.pop %v749
        %v751 = vmul.f32 %v741, 1.442695
        %v752 = vpow.pop %v751
        %v753 = vmul.f32 %v742, 1.442695
        %v754 = vpow.pop %v753
        %v755 = vmul.f32 %v743, 1.442695
        %v756 = vpow.pop %v755
        %v757 = vmul.f32 %v744, 1.442695
        %v758 = vpow.pop %v757
        %v759 = vmul.f32 %v745, 1.442695
        %v760 = vpow.pop %v759
        %v761 = vmul.f32 %v746, 1.442695
        %v762 = vpow.pop %v761
        %v763 = vsel %vm714, %v748, 0.0
        %764 = vadd.xlane.f32.xlu0 %v763
        %v765 = vpop.xlane.xlu0 %764
        %v766 = vsel %vm714, %v750, 0.0
        %767 = vadd.xlane.f32.xlu0 %v766
        %v768 = vpop.xlane.xlu0 %767
        %v769 = vsel %vm714, %v752, 0.0
        %770 = vadd.xlane.f32.xlu0 %v769
        %v771 = vpop.xlane.xlu0 %770
        %v772 = vsel %vm714, %v754, 0.0
        %773 = vadd.xlane.f32.xlu0 %v772
        %v774 = vpop.xlane.xlu0 %773
        %v775 = vsel %vm714, %v756, 0.0
        %776 = vadd.xlane.f32.xlu0 %v775
        %v777 = vpop.xlane.xlu0 %776
        %v778 = vsel %vm714, %v758, 0.0
        %779 = vadd.xlane.f32.xlu0 %v778
        %v780 = vpop.xlane.xlu0 %779
        %v781 = vsel %vm714, %v760, 0.0
        %782 = vadd.xlane.f32.xlu0 %v781
        %v783 = vpop.xlane.xlu0 %782
        %v784 = vsel %vm714, %v762, 0.0
        %785 = vadd.xlane.f32.xlu0 %v784
        %v786 = vpop.xlane.xlu0 %785
        %v787 = vrcp.pop %v765
        %v788 = vrcp.pop %v768
        %v789 = vrcp.pop %v771
        %v790 = vrcp.pop %v774
        %v791 = vrcp.pop %v777
        %v792 = vrcp.pop %v780
        %v793 = vrcp.pop %v783
        %v794 = vrcp.pop %v786
        %v795 = vmul.f32 %v748, %v787
        %v796 = vmul.f32 %v750, %v788
        %v797 = vmul.f32 %v752, %v789
        %v798 = vmul.f32 %v754, %v790
        %v799 = vmul.f32 %v756, %v791
        %v800 = vmul.f32 %v758, %v792
        %v801 = vmul.f32 %v760, %v793
        %v802 = vmul.f32 %v762, %v794
        %v803 = vpack.c.bf16 %v795, %v795
        %v804 = vpack.c.bf16 %v796, %v796
        %v805 = vpack.c.bf16 %v797, %v797
        %v806 = vpack.c.bf16 %v798, %v798
        %v807 = vpack.c.bf16 %v799, %v799
        %v808 = vpack.c.bf16 %v800, %v800
        %v809 = vpack.c.bf16 %v801, %v801
        %v810 = vpack.c.bf16 %v802, %v802
        %v813 = vunpack.c.l.b16 %v803
        %v814 = vunpack.c.l.b16 %v804
        %v815 = vpack.c.b16 %v814, %v813
        %v818 = vunpack.c.l.b16 %v598
        %v819 = vunpack.c.l.b16 %v599
        %v820 = vpack.c.b16 %v819, %v818
        %v823 = vsel %vm714, %v815, 0
        %825 = vmatpush.bf16.msra.mxu0 0
        %826 = vmatpush.bf16.msra.mxu0 0
        %827 = vmatpush.bf16.msra.mxu0 0
        %828 = vmatpush.bf16.msra.mxu0 0
        %829 = vmatpush.bf16.msra.mxu0 0
        %830 = vmatpush.bf16.msra.mxu0 0
        %831 = vmatpush.bf16.msra.mxu0 0
        %832 = vmatpush.bf16.msra.mxu0 %v820
        %833 = vmatmul.bf16.gmra.mxu0 %v823
        %v834 = vpop.f32.mrf.mxu0
        %v835 = vadd.f32 0.0, %v834
        %v836 = vpop.f32.mrf.mxu0
        %v837 = vadd.f32 0.0, %v836
        %838 = vdwg.mxu0
        %v841 = vunpack.c.l.b16 %v805
        %v842 = vunpack.c.l.b16 %v806
        %v843 = vpack.c.b16 %v842, %v841
        %844 = vrot.lane.b32.xlu0 %v820, 96
        %v845 = vpop.permute.xlu0 %844
        %v848 = vsel %vm714, %v843, 0
        %850 = vmatpush.bf16.msra.mxu0 0
        %851 = vmatpush.bf16.msra.mxu0 0
        %852 = vmatpush.bf16.msra.mxu0 0
        %853 = vmatpush.bf16.msra.mxu0 0
        %854 = vmatpush.bf16.msra.mxu0 0
        %855 = vmatpush.bf16.msra.mxu0 0
        %856 = vmatpush.bf16.msra.mxu0 0
        %857 = vmatpush.bf16.msra.mxu0 %v845
        %858 = vmatmul.bf16.gmra.mxu0 %v848
        %v859 = vpop.f32.mrf.mxu0
        %v860 = vadd.f32 0.0, %v859
        %v861 = vpop.f32.mrf.mxu0
        %v862 = vadd.f32 0.0, %v861
        %863 = vdwg.mxu0
        %v866 = vunpack.c.l.b16 %v807
        %v867 = vunpack.c.l.b16 %v808
        %v868 = vpack.c.b16 %v867, %v866
        %869 = vrot.lane.b32.xlu0 %v820, 64
        %v870 = vpop.permute.xlu0 %869
        %v873 = vsel %vm714, %v868, 0
        %875 = vmatpush.bf16.msra.mxu0 0
        %876 = vmatpush.bf16.msra.mxu0 0
        %877 = vmatpush.bf16.msra.mxu0 0
        %878 = vmatpush.bf16.msra.mxu0 0
        %879 = vmatpush.bf16.msra.mxu0 0
        %880 = vmatpush.bf16.msra.mxu0 0
        %881 = vmatpush.bf16.msra.mxu0 0
        %882 = vmatpush.bf16.msra.mxu0 %v870
        %883 = vmatmul.bf16.gmra.mxu0 %v873
        %v884 = vpop.f32.mrf.mxu0
        %v885 = vadd.f32 0.0, %v884
        %v886 = vpop.f32.mrf.mxu0
        %v887 = vadd.f32 0.0, %v886
        %888 = vdwg.mxu0
        %v891 = vunpack.c.l.b16 %v809
        %v892 = vunpack.c.l.b16 %v810
        %v893 = vpack.c.b16 %v892, %v891
        %894 = vrot.lane.b32.xlu0 %v820, 32
        %v895 = vpop.permute.xlu0 %894
        %v898 = vsel %vm714, %v893, 0
        %900 = vmatpush.bf16.msra.mxu0 0
        %901 = vmatpush.bf16.msra.mxu0 0
        %902 = vmatpush.bf16.msra.mxu0 0
        %903 = vmatpush.bf16.msra.mxu0 0
        %904 = vmatpush.bf16.msra.mxu0 0
        %905 = vmatpush.bf16.msra.mxu0 0
        %906 = vmatpush.bf16.msra.mxu0 0
        %907 = vmatpush.bf16.msra.mxu0 %v895
        %908 = vmatmul.bf16.gmra.mxu0 %v898
        %v909 = vpop.f32.mrf.mxu0
        %v910 = vadd.f32 0.0, %v909
        %v911 = vpop.f32.mrf.mxu0
        %v912 = vadd.f32 0.0, %v911
        %913 = vdwg.mxu0
        %916 = vrot.lane.b32.xlu0 %v860, 32
        %v917 = vpop.permute.xlu0 %916
        %918 = vrot.lane.b32.xlu0 %v862, 32
        %v919 = vpop.permute.xlu0 %918
        %924 = vrot.lane.b32.xlu0 %v885, 64
        %v925 = vpop.permute.xlu0 %924
        %926 = vrot.lane.b32.xlu0 %v887, 64
        %v927 = vpop.permute.xlu0 %926
        %932 = vrot.lane.b32.xlu0 %v910, 96
        %v933 = vpop.permute.xlu0 %932
        %934 = vrot.lane.b32.xlu0 %v912, 96
        %v935 = vpop.permute.xlu0 %934
        %v938 = vsel %vm610, %v835, %v917
        %v939 = vsel %vm610, %v837, %v919
        %vm940 = vcmask 523264
        %v941 = vsel %vm940, %v938, %v925
        %v942 = vsel %vm940, %v939, %v927
        %vm943 = vcmask 785408
        %v944 = vsel %vm943, %v941, %v933
        %v945 = vsel %vm943, %v942, %v935
        %v946 = vpack.c.bf16 %v945, %v944
        %v947 = vld [vmem:[#allocation2] sm:$0xf]
        %v948 = vld [vmem:[#allocation2 + $0x4] sm:$0xf]
        %v949 = vld [vmem:[#allocation2 + $0x8] sm:$0xf]
        %v950 = vld [vmem:[#allocation2 + $0xc] sm:$0xf]
        %v951 = vld [vmem:[#allocation2 + $0x10] sm:$0xf]
        %v952 = vld [vmem:[#allocation2 + $0x14] sm:$0xf]
        %v953 = vld [vmem:[#allocation2 + $0x18] sm:$0xf]
        %v954 = vld [vmem:[#allocation2 + $0x1c] sm:$0xf]
        %v955 = vld [vmem:[#allocation2 + $0x20] sm:$0xf]
        %v956 = vld [vmem:[#allocation2 + $0x24] sm:$0xf]
        %v957 = vld [vmem:[#allocation2 + $0x28] sm:$0xf]
        %v958 = vld [vmem:[#allocation2 + $0x2c] sm:$0xf]
        %v959 = vld [vmem:[#allocation2 + $0x30] sm:$0xf]
        %v960 = vld [vmem:[#allocation2 + $0x34] sm:$0xf]
        %v961 = vld [vmem:[#allocation2 + $0x38] sm:$0xf]
        %v962 = vld [vmem:[#allocation2 + $0x3c] sm:$0xf]
        %v963 = vld [vmem:[%s5] sm:$0x1]
        %v964 = vperm.slane %v963, 0
        %v981 = vunpack.c.l.b16 %v947
        %v982 = vunpack.c.l.b16 %v948
        %v983 = vunpack.c.l.b16 %v949
        %v984 = vunpack.c.l.b16 %v950
        %v985 = vunpack.c.l.b16 %v951
        %v986 = vunpack.c.l.b16 %v952
        %v987 = vunpack.c.l.b16 %v953
        %v988 = vunpack.c.l.b16 %v954
        %v989 = vunpack.c.l.b16 %v955
        %v990 = vunpack.c.l.b16 %v956
        %v991 = vunpack.c.l.b16 %v957
        %v992 = vunpack.c.l.b16 %v958
        %v993 = vunpack.c.l.b16 %v959
        %v994 = vunpack.c.l.b16 %v960
        %v995 = vunpack.c.l.b16 %v961
        %v996 = vunpack.c.l.b16 %v962
        %v997 = vpack.c.b16 %v982, %v981
        %v998 = vpack.c.b16 %v984, %v983
        %v999 = vpack.c.b16 %v986, %v985
        %v1000 = vpack.c.b16 %v988, %v987
        %v1001 = vpack.c.b16 %v990, %v989
        %v1002 = vpack.c.b16 %v992, %v991
        %v1003 = vpack.c.b16 %v994, %v993
        %v1004 = vpack.c.b16 %v996, %v995
        %1013 = vmatpush.bf16.msra.mxu0 %v1004
        %1014 = vmatpush.bf16.msra.mxu0 %v1003
        %1015 = vmatpush.bf16.msra.mxu0 %v1002
        %1016 = vmatpush.bf16.msra.mxu0 %v1001
        %1017 = vmatpush.bf16.msra.mxu0 %v1000
        %1018 = vmatpush.bf16.msra.mxu0 %v999
        %1019 = vmatpush.bf16.msra.mxu0 %v998
        %1020 = vmatpush.bf16.msra.mxu0 %v997
        %1021 = vmatmul.bf16.gmra.mxu0 %v946
        %v1022 = vpop.f32.mrf.mxu0
        %v1023 = vadd.f32 %v964, %v1022
        %v1024 = vpop.f32.mrf.mxu0
        %v1025 = vadd.f32 %v964, %v1024
        %1026 = vdwg.mxu0
        %v1027 = vadd.f32 %v381, %v1023
        %v1028 = vadd.f32 %v382, %v1025
        %v1029 = vld [vmem:[%s5 + $0x1] sm:$0x1]
        %v1030 = vld [vmem:[%s5 + $0x2] sm:$0x1]
        %1031 = vadd.xlane.f32.xlu0 %v1027
        %v1032 = vpop.xlane.xlu0 %1031
        %1033 = vadd.xlane.f32.xlu0 %v1028
        %v1034 = vpop.xlane.xlu0 %1033
        %v1035 = vrcp.pop 128.0
        %v1036 = vmul.f32 128.0, %v1035
        %v1037 = vsub.f32 1.0, %v1036
        %v1038 = vmul.f32 %v1035, %v1037
        %v1039 = vadd.f32 %v1035, %v1038
        %vm1040 = vweird.f32 %v1035
        %v1041 = vsel %vm1040, %v1035, %v1039
        %v1042 = vmul.f32 %v1032, %v1041
        %v1043 = vmul.f32 %v1034, %v1041
        %v1044 = vsub.f32 %v1027, %v1042
        %v1045 = vsub.f32 %v1028, %v1043
        %v1046 = vmul.f32 %v1044, %v1044
        %v1047 = vmul.f32 %v1045, %v1045
        %1048 = vadd.xlane.f32.xlu0 %v1046
        %v1049 = vpop.xlane.xlu0 %1048
        %1050 = vadd.xlane.f32.xlu0 %v1047
        %v1051 = vpop.xlane.xlu0 %1050
        %v1052 = vmul.f32 %v1049, %v1041
        %v1053 = vmul.f32 %v1051, %v1041
        %v1054 = vadd.f32 %v1052, 1e-05
        %v1055 = vadd.f32 %v1053, 1e-05
        %v1056 = vrsqrt.pop %v1054
        %v1057 = vmul.f32 %v1056, %v1054
        %v1058 = vmul.f32 %v1057, %v1056
        %v1059 = vmul.f32 0.5, %v1058
        %v1060 = vsub.f32 1.5, %v1059
        %v1061 = vmul.f32 %v1056, %v1060
        %vm1062 = vweird.f32 %v1054
        %vm1063 = vweird.f32 %v1056
        %vm1064 = vmor %vm1062, %vm1063
        %v1065 = vsel %vm1064, %v1056, %v1061
        %v1066 = vrsqrt.pop %v1055
        %v1067 = vmul.f32 %v1066, %v1055
        %v1068 = vmul.f32 %v1067, %v1066
        %v1069 = vmul.f32 0.5, %v1068
        %v1070 = vsub.f32 1.5, %v1069
        %v1071 = vmul.f32 %v1066, %v1070
        %vm1072 = vweird.f32 %v1055
        %vm1073 = vweird.f32 %v1066
        %vm1074 = vmor %vm1072, %vm1073
        %v1075 = vsel %vm1074, %v1066, %v1071
        %v1076 = vmul.f32 %v1044, %v1065
        %v1077 = vmul.f32 %v1045, %v1075
        %v1078 = vperm.slane %v1029, 0
        %v1079 = vmul.f32 %v1076, %v1078
        %v1080 = vmul.f32 %v1077, %v1078
        %v1081 = vperm.slane %v1030, 0
        %v1082 = vadd.f32 %v1079, %v1081
        %v1083 = vadd.f32 %v1080, %v1081
        %v1084 = vpack.c.bf16 %v1083, %v1082
        %v1085 = vld [vmem:[%s6] sm:$0xff]
        %v1086 = vld [vmem:[%s6 + $0x8] sm:$0xff]
        %v1087 = vld [vmem:[%s6 + $0x10] sm:$0xff]
        %v1088 = vld [vmem:[%s6 + $0x18] sm:$0xff]
        %v1089 = vld [vmem:[%s6 + $0x20] sm:$0xff]
        %v1090 = vld [vmem:[%s6 + $0x28] sm:$0xff]
        %v1091 = vld [vmem:[%s6 + $0x30] sm:$0xff]
        %v1092 = vld [vmem:[%s6 + $0x38] sm:$0xff]
        %v1093 = vld [vmem:[%s6 + $0x40] sm:$0xff]
        %v1094 = vld [vmem:[%s6 + $0x48] sm:$0xff]
        %v1095 = vld [vmem:[%s6 + $0x50] sm:$0xff]
        %v1096 = vld [vmem:[%s6 + $0x58] sm:$0xff]
        %v1097 = vld [vmem:[%s6 + $0x60] sm:$0xff]
        %v1098 = vld [vmem:[%s6 + $0x68] sm:$0xff]
        %v1099 = vld [vmem:[%s6 + $0x70] sm:$0xff]
        %v1100 = vld [vmem:[%s6 + $0x78] sm:$0xff]
        %v1101 = vld [vmem:[%s7] sm:$0x3]
        %v1103 = vperm.slane %v1101, 0
        %v1104 = vperm.slane %v1101, 1
        %v1123 = vunpack.c.l.b16 %v1085
        %v1124 = vunpack.c.h.b16 %v1085
        %v1125 = vunpack.c.l.b16 %v1086
        %v1126 = vunpack.c.h.b16 %v1086
        %v1127 = vunpack.c.l.b16 %v1087
        %v1128 = vunpack.c.h.b16 %v1087
        %v1129 = vunpack.c.l.b16 %v1088
        %v1130 = vunpack.c.h.b16 %v1088
        %v1131 = vunpack.c.l.b16 %v1089
        %v1132 = vunpack.c.h.b16 %v1089
        %v1133 = vunpack.c.l.b16 %v1090
        %v1134 = vunpack.c.h.b16 %v1090
        %v1135 = vunpack.c.l.b16 %v1091
        %v1136 = vunpack.c.h.b16 %v1091
        %v1137 = vunpack.c.l.b16 %v1092
        %v1138 = vunpack.c.h.b16 %v1092
        %v1139 = vunpack.c.l.b16 %v1093
        %v1140 = vunpack.c.h.b16 %v1093
        %v1141 = vunpack.c.l.b16 %v1094
        %v1142 = vunpack.c.h.b16 %v1094
        %v1143 = vunpack.c.l.b16 %v1095
        %v1144 = vunpack.c.h.b16 %v1095
        %v1145 = vunpack.c.l.b16 %v1096
        %v1146 = vunpack.c.h.b16 %v1096
        %v1147 = vunpack.c.l.b16 %v1097
        %v1148 = vunpack.c.h.b16 %v1097
        %v1149 = vunpack.c.l.b16 %v1098
        %v1150 = vunpack.c.h.b16 %v1098
        %v1151 = vunpack.c.l.b16 %v1099
        %v1152 = vunpack.c.h.b16 %v1099
        %v1153 = vunpack.c.l.b16 %v1100
        %v1154 = vunpack.c.h.b16 %v1100
        %v1155 = vpack.c.b16 %v1125, %v1123
        %v1156 = vpack.c.b16 %v1126, %v1124
        %v1157 = vpack.c.b16 %v1129, %v1127
        %v1158 = vpack.c.b16 %v1130, %v1128
        %v1159 = vpack.c.b16 %v1133, %v1131
        %v1160 = vpack.c.b16 %v1134, %v1132
        %v1161 = vpack.c.b16 %v1137, %v1135
        %v1162 = vpack.c.b16 %v1138, %v1136
        %v1163 = vpack.c.b16 %v1141, %v1139
        %v1164 = vpack.c.b16 %v1142, %v1140
        %v1165 = vpack.c.b16 %v1145, %v1143
        %v1166 = vpack.c.b16 %v1146, %v1144
        %v1167 = vpack.c.b16 %v1149, %v1147
        %v1168 = vpack.c.b16 %v1150, %v1148
        %v1169 = vpack.c.b16 %v1153, %v1151
        %v1170 = vpack.c.b16 %v1154, %v1152
        %1187 = vmatpush.bf16.msra.mxu0 %v1169
        %1188 = vmatpush.bf16.msra.mxu0 %v1167
        %1189 = vmatpush.bf16.msra.mxu0 %v1165
        %1190 = vmatpush.bf16.msra.mxu0 %v1163
        %1191 = vmatpush.bf16.msra.mxu0 %v1161
        %1192 = vmatpush.bf16.msra.mxu0 %v1159
        %1193 = vmatpush.bf16.msra.mxu0 %v1157
        %1194 = vmatpush.bf16.msra.mxu0 %v1155
        %1195 = vmatmul.bf16.gmra.mxu0 %v1084
        %v1196 = vpop.f32.mrf.mxu0
        %v1197 = vadd.f32 %v1103, %v1196
        %v1198 = vpop.f32.mrf.mxu0
        %v1199 = vadd.f32 %v1103, %v1198
        %1200 = vdwg.mxu0
        %1201 = vmatpush.bf16.msra.mxu0 %v1170
        %1202 = vmatpush.bf16.msra.mxu0 %v1168
        %1203 = vmatpush.bf16.msra.mxu0 %v1166
        %1204 = vmatpush.bf16.msra.mxu0 %v1164
        %1205 = vmatpush.bf16.msra.mxu0 %v1162
        %1206 = vmatpush.bf16.msra.mxu0 %v1160
        %1207 = vmatpush.bf16.msra.mxu0 %v1158
        %1208 = vmatpush.bf16.msra.mxu0 %v1156
        %1209 = vmatmul.bf16.gmra.mxu0 %v1084
        %v1210 = vpop.f32.mrf.mxu0
        %v1211 = vadd.f32 %v1104, %v1210
        %v1212 = vpop.f32.mrf.mxu0
        %v1213 = vadd.f32 %v1104, %v1212
        %1214 = vdwg.mxu0
        %v1215 = vmul.f32 %v1197, 0.5
        %v1216 = vmul.f32 %v1211, 0.5
        %v1217 = vmul.f32 %v1199, 0.5
        %v1218 = vmul.f32 %v1213, 0.5
        %v1219 = vmul.f32 %v1197, 0.044715
        %v1220 = vmul.f32 %v1211, 0.044715
        %v1221 = vmul.f32 %v1199, 0.044715
        %v1222 = vmul.f32 %v1213, 0.044715
        %v1223 = vmul.f32 %v1219, %v1197
        %v1224 = vmul.f32 %v1220, %v1211
        %v1225 = vmul.f32 %v1221, %v1199
        %v1226 = vmul.f32 %v1222, %v1213
        %v1227 = vmul.f32 %v1223, %v1197
        %v1228 = vmul.f32 %v1224, %v1211
        %v1229 = vmul.f32 %v1225, %v1199
        %v1230 = vmul.f32 %v1226, %v1213
        %v1231 = vadd.f32 %v1197, %v1227
        %v1232 = vadd.f32 %v1211, %v1228
        %v1233 = vadd.f32 %v1199, %v1229
        %v1234 = vadd.f32 %v1213, %v1230
        %v1235 = vmul.f32 %v1231, 0.7978846
        %v1236 = vmul.f32 %v1232, 0.7978846
        %v1237 = vmul.f32 %v1233, 0.7978846
        %v1238 = vmul.f32 %v1234, 0.7978846
        %v1239 = vtanh.pop %v1235
        %v1240 = vtanh.pop %v1236
        %v1241 = vtanh.pop %v1237
        %v1242 = vtanh.pop %v1238
        %v1243 = vadd.f32 %v1239, 1.0
        %v1244 = vadd.f32 %v1240, 1.0
        %v1245 = vadd.f32 %v1241, 1.0
        %v1246 = vadd.f32 %v1242, 1.0
        %v1247 = vmul.f32 %v1215, %v1243
        %v1248 = vmul.f32 %v1216, %v1244
        %v1249 = vmul.f32 %v1217, %v1245
        %v1250 = vmul.f32 %v1218, %v1246
        %v1251 = vpack.c.bf16 %v1249, %v1247
        %v1252 = vpack.c.bf16 %v1250, %v1248
        %v1253 = vld [vmem:[#allocation5] sm:$0xf]
        %v1254 = vld [vmem:[#allocation5 + $0x4] sm:$0xf]
        %v1255 = vld [vmem:[#allocation5 + $0x8] sm:$0xf]
        %v1256 = vld [vmem:[#allocation5 + $0xc] sm:$0xf]
        %v1257 = vld [vmem:[#allocation5 + $0x10] sm:$0xf]
        %v1258 = vld [vmem:[#allocation5 + $0x14] sm:$0xf]
        %v1259 = vld [vmem:[#allocation5 + $0x18] sm:$0xf]
        %v1260 = vld [vmem:[#allocation5 + $0x1c] sm:$0xf]
        %v1261 = vld [vmem:[#allocation5 + $0x20] sm:$0xf]
        %v1262 = vld [vmem:[#allocation5 + $0x24] sm:$0xf]
        %v1263 = vld [vmem:[#allocation5 + $0x28] sm:$0xf]
        %v1264 = vld [vmem:[#allocation5 + $0x2c] sm:$0xf]
        %v1265 = vld [vmem:[#allocation5 + $0x30] sm:$0xf]
        %v1266 = vld [vmem:[#allocation5 + $0x34] sm:$0xf]
        %v1267 = vld [vmem:[#allocation5 + $0x38] sm:$0xf]
        %v1268 = vld [vmem:[#allocation5 + $0x3c] sm:$0xf]
        %v1269 = vld [vmem:[#allocation5 + $0x40] sm:$0xf]
        %v1270 = vld [vmem:[#allocation5 + $0x44] sm:$0xf]
        %v1271 = vld [vmem:[#allocation5 + $0x48] sm:$0xf]
        %v1272 = vld [vmem:[#allocation5 + $0x4c] sm:$0xf]
        %v1273 = vld [vmem:[#allocation5 + $0x50] sm:$0xf]
        %v1274 = vld [vmem:[#allocation5 + $0x54] sm:$0xf]
        %v1275 = vld [vmem:[#allocation5 + $0x58] sm:$0xf]
        %v1276 = vld [vmem:[#allocation5 + $0x5c] sm:$0xf]
        %v1277 = vld [vmem:[#allocation5 + $0x60] sm:$0xf]
        %v1278 = vld [vmem:[#allocation5 + $0x64] sm:$0xf]
        %v1279 = vld [vmem:[#allocation5 + $0x68] sm:$0xf]
        %v1280 = vld [vmem:[#allocation5 + $0x6c] sm:$0xf]
        %v1281 = vld [vmem:[#allocation5 + $0x70] sm:$0xf]
        %v1282 = vld [vmem:[#allocation5 + $0x74] sm:$0xf]
        %v1283 = vld [vmem:[#allocation5 + $0x78] sm:$0xf]
        %v1284 = vld [vmem:[#allocation5 + $0x7c] sm:$0xf]
        %v1285 = vld [vmem:[%s5 + $0x3] sm:$0x1]
        %v1286 = vperm.slane %v1285, 0
        %v1319 = vunpack.c.l.b16 %v1253
        %v1320 = vunpack.c.l.b16 %v1254
        %v1321 = vunpack.c.l.b16 %v1255
        %v1322 = vunpack.c.l.b16 %v1256
        %v1323 = vunpack.c.l.b16 %v1257
        %v1324 = vunpack.c.l.b16 %v1258
        %v1325 = vunpack.c.l.b16 %v1259
        %v1326 = vunpack.c.l.b16 %v1260
        %v1327 = vunpack.c.l.b16 %v1261
        %v1328 = vunpack.c.l.b16 %v1262
        %v1329 = vunpack.c.l.b16 %v1263
        %v1330 = vunpack.c.l.b16 %v1264
        %v1331 = vunpack.c.l.b16 %v1265
        %v1332 = vunpack.c.l.b16 %v1266
        %v1333 = vunpack.c.l.b16 %v1267
        %v1334 = vunpack.c.l.b16 %v1268
        %v1335 = vunpack.c.l.b16 %v1269
        %v1336 = vunpack.c.l.b16 %v1270
        %v1337 = vunpack.c.l.b16 %v1271
        %v1338 = vunpack.c.l.b16 %v1272
        %v1339 = vunpack.c.l.b16 %v1273
        %v1340 = vunpack.c.l.b16 %v1274
        %v1341 = vunpack.c.l.b16 %v1275
        %v1342 = vunpack.c.l.b16 %v1276
        %v1343 = vunpack.c.l.b16 %v1277
        %v1344 = vunpack.c.l.b16 %v1278
        %v1345 = vunpack.c.l.b16 %v1279
        %v1346 = vunpack.c.l.b16 %v1280
        %v1347 = vunpack.c.l.b16 %v1281
        %v1348 = vunpack.c.l.b16 %v1282
        %v1349 = vunpack.c.l.b16 %v1283
        %v1350 = vunpack.c.l.b16 %v1284
        %v1351 = vpack.c.b16 %v1320, %v1319
        %v1352 = vpack.c.b16 %v1322, %v1321
        %v1353 = vpack.c.b16 %v1324, %v1323
        %v1354 = vpack.c.b16 %v1326, %v1325
        %v1355 = vpack.c.b16 %v1328, %v1327
        %v1356 = vpack.c.b16 %v1330, %v1329
        %v1357 = vpack.c.b16 %v1332, %v1331
        %v1358 = vpack.c.b16 %v1334, %v1333
        %v1359 = vpack.c.b16 %v1336, %v1335
        %v1360 = vpack.c.b16 %v1338, %v1337
        %v1361 = vpack.c.b16 %v1340, %v1339
        %v1362 = vpack.c.b16 %v1342, %v1341
        %v1363 = vpack.c.b16 %v1344, %v1343
        %v1364 = vpack.c.b16 %v1346, %v1345
        %v1365 = vpack.c.b16 %v1348, %v1347
        %v1366 = vpack.c.b16 %v1350, %v1349
        %1383 = vmatpush.bf16.msra.mxu0 %v1358
        %1384 = vmatpush.bf16.msra.mxu0 %v1357
        %1385 = vmatpush.bf16.msra.mxu0 %v1356
        %1386 = vmatpush.bf16.msra.mxu0 %v1355
        %1387 = vmatpush.bf16.msra.mxu0 %v1354
        %1388 = vmatpush.bf16.msra.mxu0 %v1353
        %1389 = vmatpush.bf16.msra.mxu0 %v1352
        %1390 = vmatpush.bf16.msra.mxu0 %v1351
        %1391 = vmatmul.bf16.gmra.mxu0 %v1251
        %v1392 = vpop.f32.mrf.mxu0
        %v1393 = vadd.f32 %v1286, %v1392
        %v1394 = vpop.f32.mrf.mxu0
        %v1395 = vadd.f32 %v1286, %v1394
        %1396 = vdwg.mxu0
        %1397 = vmatpush.bf16.msra.mxu0 %v1366
        %1398 = vmatpush.bf16.msra.mxu0 %v1365
        %1399 = vmatpush.bf16.msra.mxu0 %v1364
        %1400 = vmatpush.bf16.msra.mxu0 %v1363
        %1401 = vmatpush.bf16.msra.mxu0 %v1362
        %1402 = vmatpush.bf16.msra.mxu0 %v1361
        %1403 = vmatpush.bf16.msra.mxu0 %v1360
        %1404 = vmatpush.bf16.msra.mxu0 %v1359
        %1405 = vmatmul.bf16.gmra.mxu0 %v1252
        %v1406 = vpop.f32.mrf.mxu0
        %v1407 = vadd.f32 %v1393, %v1406
        %v1408 = vpop.f32.mrf.mxu0
        %v1409 = vadd.f32 %v1395, %v1408
        %1410 = vdwg.mxu0
        %v1411 = vadd.f32 %v1082, %v1407
        %v1412 = vadd.f32 %v1083, %v1409
        %v1413 = vld [vmem:[%s5 + $0x4] sm:$0x1]
        %v1414 = vld [vmem:[%s5 + $0x5] sm:$0x1]
        %1415 = vadd.xlane.f32.xlu0 %v1411
        %v1416 = vpop.xlane.xlu0 %1415
        %1417 = vadd.xlane.f32.xlu0 %v1412
        %v1418 = vpop.xlane.xlu0 %1417
        %v1419 = vmul.f32 %v1416, %v1041
        %v1420 = vmul.f32 %v1418, %v1041
        %v1421 = vsub.f32 %v1411, %v1419
        %v1422 = vsub.f32 %v1412, %v1420
        %v1423 = vmul.f32 %v1421, %v1421
        %v1424 = vmul.f32 %v1422, %v1422
        %1425 = vadd.xlane.f32.xlu0 %v1423
        %v1426 = vpop.xlane.xlu0 %1425
        %1427 = vadd.xlane.f32.xlu0 %v1424
        %v1428 = vpop.xlane.xlu0 %1427
        %v1429 = vmul.f32 %v1426, %v1041
        %v1430 = vmul.f32 %v1428, %v1041
        %v1431 = vadd.f32 %v1429, 1e-05
        %v1432 = vadd.f32 %v1430, 1e-05
        %v1433 = vrsqrt.pop %v1431
        %v1434 = vmul.f32 %v1433, %v1431
        %v1435 = vmul.f32 %v1434, %v1433
        %v1436 = vmul.f32 0.5, %v1435
        %v1437 = vsub.f32 1.5, %v1436
        %v1438 = vmul.f32 %v1433, %v1437
        %vm1439 = vweird.f32 %v1431
        %vm1440 = vweird.f32 %v1433
        %vm1441 = vmor %vm1439, %vm1440
        %v1442 = vsel %vm1441, %v1433, %v1438
        %v1443 = vrsqrt.pop %v1432
        %v1444 = vmul.f32 %v1443, %v1432
        %v1445 = vmul.f32 %v1444, %v1443
        %v1446 = vmul.f32 0.5, %v1445
        %v1447 = vsub.f32 1.5, %v1446
        %v1448 = vmul.f32 %v1443, %v1447
        %vm1449 = vweird.f32 %v1432
        %vm1450 = vweird.f32 %v1443
        %vm1451 = vmor %vm1449, %vm1450
        %v1452 = vsel %vm1451, %v1443, %v1448
        %v1453 = vmul.f32 %v1421, %v1442
        %v1454 = vmul.f32 %v1422, %v1452
        %v1455 = vperm.slane %v1413, 0
        %v1456 = vmul.f32 %v1453, %v1455
        %v1457 = vmul.f32 %v1454, %v1455
        %v1458 = vperm.slane %v1414, 0
        %v1459 = vadd.f32 %v1456, %v1458
        %v1460 = vadd.f32 %v1457, %v1458
        %v1461 = vpack.c.bf16 %v1460, %v1459
        %s1462 = scalar_lea.vmem %s2, 192
        %v1463 = vld [vmem:[%s1462] sm:$0xff]
        %v1464 = vld [vmem:[%s1462 + $0x8] sm:$0xf]
        %v1465 = vld [vmem:[%s1462 + $0xc] sm:$0xff]
        %v1466 = vld [vmem:[%s1462 + $0x14] sm:$0xf]
        %v1467 = vld [vmem:[%s1462 + $0x18] sm:$0xff]
        %v1468 = vld [vmem:[%s1462 + $0x20] sm:$0xf]
        %v1469 = vld [vmem:[%s1462 + $0x24] sm:$0xff]
        %v1470 = vld [vmem:[%s1462 + $0x2c] sm:$0xf]
        %v1471 = vld [vmem:[%s1462 + $0x30] sm:$0xff]
        %v1472 = vld [vmem:[%s1462 + $0x38] sm:$0xf]
        %v1473 = vld [vmem:[%s1462 + $0x3c] sm:$0xff]
        %v1474 = vld [vmem:[%s1462 + $0x44] sm:$0xf]
        %v1475 = vld [vmem:[%s1462 + $0x48] sm:$0xff]
        %v1476 = vld [vmem:[%s1462 + $0x50] sm:$0xf]
        %v1477 = vld [vmem:[%s1462 + $0x54] sm:$0xff]
        %v1478 = vld [vmem:[%s1462 + $0x5c] sm:$0xf]
        %v1479 = vld [vmem:[%s1462 + $0x60] sm:$0xff]
        %v1480 = vld [vmem:[%s1462 + $0x68] sm:$0xf]
        %v1481 = vld [vmem:[%s1462 + $0x6c] sm:$0xff]
        %v1482 = vld [vmem:[%s1462 + $0x74] sm:$0xf]
        %v1483 = vld [vmem:[%s1462 + $0x78] sm:$0xff]
        %v1484 = vld [vmem:[%s1462 + $0x80] sm:$0xf]
        %v1485 = vld [vmem:[%s1462 + $0x84] sm:$0xff]
        %v1486 = vld [vmem:[%s1462 + $0x8c] sm:$0xf]
        %v1487 = vld [vmem:[%s1462 + $0x90] sm:$0xff]
        %v1488 = vld [vmem:[%s1462 + $0x98] sm:$0xf]
        %v1489 = vld [vmem:[%s1462 + $0x9c] sm:$0xff]
        %v1490 = vld [vmem:[%s1462 + $0xa4] sm:$0xf]
        %v1491 = vld [vmem:[%s1462 + $0xa8] sm:$0xff]
        %v1492 = vld [vmem:[%s1462 + $0xb0] sm:$0xf]
        %v1493 = vld [vmem:[%s1462 + $0xb4] sm:$0xff]
        %v1494 = vld [vmem:[%s1462 + $0xbc] sm:$0xf]
        %s1495 = scalar_lea.vmem %s3, 3
        %v1496 = vld [vmem:[%s1495] sm:$0x7]
        %v1498 = vperm.slane %v1496, 0
        %v1499 = vperm.slane %v1496, 1
        %v1500 = vperm.slane %v1496, 2
        %v1536 = vunpack.c.l.b16 %v1463
        %v1537 = vunpack.c.h.b16 %v1463
        %v1538 = vunpack.c.l.b16 %v1464
        %v1539 = vunpack.c.l.b16 %v1465
        %v1540 = vunpack.c.h.b16 %v1465
        %v1541 = vunpack.c.l.b16 %v1466
        %v1542 = vunpack.c.l.b16 %v1467
        %v1543 = vunpack.c.h.b16 %v1467
        %v1544 = vunpack.c.l.b16 %v1468
        %v1545 = vunpack.c.l.b16 %v1469
        %v1546 = vunpack.c.h.b16 %v1469
        %v1547 = vunpack.c.l.b16 %v1470
        %v1548 = vunpack.c.l.b16 %v1471
        %v1549 = vunpack.c.h.b16 %v1471
        %v1550 = vunpack.c.l.b16 %v1472
        %v1551 = vunpack.c.l.b16 %v1473
        %v1552 = vunpack.c.h.b16 %v1473
        %v1553 = vunpack.c.l.b16 %v1474
        %v1554 = vunpack.c.l.b16 %v1475
        %v1555 = vunpack.c.h.b16 %v1475
        %v1556 = vunpack.c.l.b16 %v1476
        %v1557 = vunpack.c.l.b16 %v1477
        %v1558 = vunpack.c.h.b16 %v1477
        %v1559 = vunpack.c.l.b16 %v1478
        %v1560 = vunpack.c.l.b16 %v1479
        %v1561 = vunpack.c.h.b16 %v1479
        %v1562 = vunpack.c.l.b16 %v1480
        %v1563 = vunpack.c.l.b16 %v1481
        %v1564 = vunpack.c.h.b16 %v1481
        %v1565 = vunpack.c.l.b16 %v1482
        %v1566 = vunpack.c.l.b16 %v1483
        %v1567 = vunpack.c.h.b16 %v1483
        %v1568 = vunpack.c.l.b16 %v1484
        %v1569 = vunpack.c.l.b16 %v1485
        %v1570 = vunpack.c.h.b16 %v1485
        %v1571 = vunpack.c.l.b16 %v1486
        %v1572 = vunpack.c.l.b16 %v1487
        %v1573 = vunpack.c.h.b16 %v1487
        %v1574 = vunpack.c.l.b16 %v1488
        %v1575 = vunpack.c.l.b16 %v1489
        %v1576 = vunpack.c.h.b16 %v1489
        %v1577 = vunpack.c.l.b16 %v1490
        %v1578 = vunpack.c.l.b16 %v1491
        %v1579 = vunpack.c.h.b16 %v1491
        %v1580 = vunpack.c.l.b16 %v1492
        %v1581 = vunpack.c.l.b16 %v1493
        %v1582 = vunpack.c.h.b16 %v1493
        %v1583 = vunpack.c.l.b16 %v1494
        %v1584 = vpack.c.b16 %v1539, %v1536
        %v1585 = vpack.c.b16 %v1540, %v1537
        %v1586 = vpack.c.b16 %v1541, %v1538
        %v1587 = vpack.c.b16 %v1545, %v1542
        %v1588 = vpack.c.b16 %v1546, %v1543
        %v1589 = vpack.c.b16 %v1547, %v1544
        %v1590 = vpack.c.b16 %v1551, %v1548
        %v1591 = vpack.c.b16 %v1552, %v1549
        %v1592 = vpack.c.b16 %v1553, %v1550
        %v1593 = vpack.c.b16 %v1557, %v1554
        %v1594 = vpack.c.b16 %v1558, %v1555
        %v1595 = vpack.c.b16 %v1559, %v1556
        %v1596 = vpack.c.b16 %v1563, %v1560
        %v1597 = vpack.c.b16 %v1564, %v1561
        %v1598 = vpack.c.b16 %v1565, %v1562
        %v1599 = vpack.c.b16 %v1569, %v1566
        %v1600 = vpack.c.b16 %v1570, %v1567
        %v1601 = vpack.c.b16 %v1571, %v1568
        %v1602 = vpack.c.b16 %v1575, %v1572
        %v1603 = vpack.c.b16 %v1576, %v1573
        %v1604 = vpack.c.b16 %v1577, %v1574
        %v1605 = vpack.c.b16 %v1581, %v1578
        %v1606 = vpack.c.b16 %v1582, %v1579
        %v1607 = vpack.c.b16 %v1583, %v1580
        %1632 = vmatpush.bf16.msra.mxu0 %v1605
        %1633 = vmatpush.bf16.msra.mxu0 %v1602
        %1634 = vmatpush.bf16.msra.mxu0 %v1599
        %1635 = vmatpush.bf16.msra.mxu0 %v1596
        %1636 = vmatpush.bf16.msra.mxu0 %v1593
        %1637 = vmatpush.bf16.msra.mxu0 %v1590
        %1638 = vmatpush.bf16.msra.mxu0 %v1587
        %1639 = vmatpush.bf16.msra.mxu0 %v1584
        %1640 = vmatmul.bf16.gmra.mxu0 %v1461
        %v1641 = vpop.f32.mrf.mxu0
        %v1642 = vadd.f32 %v1498, %v1641
        %v1643 = vpop.f32.mrf.mxu0
        %v1644 = vadd.f32 %v1498, %v1643
        %1645 = vdwg.mxu0
        %1646 = vmatpush.bf16.msra.mxu0 %v1606
        %1647 = vmatpush.bf16.msra.mxu0 %v1603
        %1648 = vmatpush.bf16.msra.mxu0 %v1600
        %1649 = vmatpush.bf16.msra.mxu0 %v1597
        %1650 = vmatpush.bf16.msra.mxu0 %v1594
        %1651 = vmatpush.bf16.msra.mxu0 %v1591
        %1652 = vmatpush.bf16.msra.mxu0 %v1588
        %1653 = vmatpush.bf16.msra.mxu0 %v1585
        %1654 = vmatmul.bf16.gmra.mxu0 %v1461
        %v1655 = vpop.f32.mrf.mxu0
        %v1656 = vadd.f32 %v1499, %v1655
        %v1657 = vpop.f32.mrf.mxu0
        %v1658 = vadd.f32 %v1499, %v1657
        %1659 = vdwg.mxu0
        %1660 = vmatpush.bf16.msra.mxu0 %v1607
        %1661 = vmatpush.bf16.msra.mxu0 %v1604
        %1662 = vmatpush.bf16.msra.mxu0 %v1601
        %1663 = vmatpush.bf16.msra.mxu0 %v1598
        %1664 = vmatpush.bf16.msra.mxu0 %v1595
        %1665 = vmatpush.bf16.msra.mxu0 %v1592
        %1666 = vmatpush.bf16.msra.mxu0 %v1589
        %1667 = vmatpush.bf16.msra.mxu0 %v1586
        %1668 = vmatmul.bf16.gmra.mxu0 %v1461
        %v1669 = vpop.f32.mrf.mxu0
        %v1670 = vadd.f32 %v1500, %v1669
        %v1671 = vpop.f32.mrf.mxu0
        %v1672 = vadd.f32 %v1500, %v1671
        %1673 = vdwg.mxu0
        %v1674 = vpack.c.bf16 %v1642, %v1642
        %v1675 = vpack.c.bf16 %v1644, %v1644
        %v1676 = vpack.c.bf16 %v1656, %v1656
        %v1677 = vpack.c.bf16 %v1658, %v1658
        %v1678 = vpack.c.bf16 %v1670, %v1670
        %v1679 = vpack.c.bf16 %v1672, %v1672
        %v1682 = vunpack.c.l.b16 %v1674
        %v1683 = vunpack.c.l.b16 %v1675
        %v1684 = vpack.c.b16 %v1683, %v1682
        %v1687 = vunpack.c.l.b16 %v1676
        %v1688 = vunpack.c.l.b16 %v1677
        %v1689 = vpack.c.b16 %v1688, %v1687
        %v1691 = vsel %vm610, %v1684, 0
        %v1694 = vsel %vm610, %v1689, 0
        %1696 = vmatpush.bf16.xpose.msra.mxu0 0
        %1697 = vmatpush.bf16.xpose.msra.mxu0 0
        %1698 = vmatpush.bf16.xpose.msra.mxu0 0
        %1699 = vmatpush.bf16.xpose.msra.mxu0 0
        %1700 = vmatpush.bf16.xpose.msra.mxu0 0
        %1701 = vmatpush.bf16.xpose.msra.mxu0 0
        %1702 = vmatpush.bf16.xpose.msra.mxu0 0
        %1703 = vmatpush.bf16.xpose.msra.mxu0 %v1694
        %1704 = vmatmul.bf16.gmra.mxu0 %v1691
        %v1705 = vpop.f32.mrf.mxu0
        %v1706 = vadd.f32 0.0, %v1705
        %v1707 = vpop.f32.mrf.mxu0
        %v1708 = vadd.f32 0.0, %v1707
        %1709 = vdwg.mxu0
        %1710 = vrot.lane.b32.xlu0 %v1684, 96
        %v1711 = vpop.permute.xlu0 %1710
        %1712 = vrot.lane.b32.xlu0 %v1689, 96
        %v1713 = vpop.permute.xlu0 %1712
        %v1715 = vsel %vm610, %v1711, 0
        %v1718 = vsel %vm610, %v1713, 0
        %1720 = vmatpush.bf16.xpose.msra.mxu0 0
        %1721 = vmatpush.bf16.xpose.msra.mxu0 0
        %1722 = vmatpush.bf16.xpose.msra.mxu0 0
        %1723 = vmatpush.bf16.xpose.msra.mxu0 0
        %1724 = vmatpush.bf16.xpose.msra.mxu0 0
        %1725 = vmatpush.bf16.xpose.msra.mxu0 0
        %1726 = vmatpush.bf16.xpose.msra.mxu0 0
        %1727 = vmatpush.bf16.xpose.msra.mxu0 %v1718
        %1728 = vmatmul.bf16.gmra.mxu0 %v1715
        %v1729 = vpop.f32.mrf.mxu0
        %v1730 = vadd.f32 0.0, %v1729
        %v1731 = vpop.f32.mrf.mxu0
        %v1732 = vadd.f32 0.0, %v1731
        %1733 = vdwg.mxu0
        %1734 = vrot.lane.b32.xlu0 %v1684, 64
        %v1735 = vpop.permute.xlu0 %1734
        %1736 = vrot.lane.b32.xlu0 %v1689, 64
        %v1737 = vpop.permute.xlu0 %1736
        %v1739 = vsel %vm610, %v1735, 0
        %v1742 = vsel %vm610, %v1737, 0
        %1744 = vmatpush.bf16.xpose.msra.mxu0 0
        %1745 = vmatpush.bf16.xpose.msra.mxu0 0
        %1746 = vmatpush.bf16.xpose.msra.mxu0 0
        %1747 = vmatpush.bf16.xpose.msra.mxu0 0
        %1748 = vmatpush.bf16.xpose.msra.mxu0 0
        %1749 = vmatpush.bf16.xpose.msra.mxu0 0
        %1750 = vmatpush.bf16.xpose.msra.mxu0 0
        %1751 = vmatpush.bf16.xpose.msra.mxu0 %v1742
        %1752 = vmatmul.bf16.gmra.mxu0 %v1739
        %v1753 = vpop.f32.mrf.mxu0
        %v1754 = vadd.f32 0.0, %v1753
        %v1755 = vpop.f32.mrf.mxu0
        %v1756 = vadd.f32 0.0, %v1755
        %1757 = vdwg.mxu0
        %1758 = vrot.lane.b32.xlu0 %v1684, 32
        %v1759 = vpop.permute.xlu0 %1758
        %1760 = vrot.lane.b32.xlu0 %v1689, 32
        %v1761 = vpop.permute.xlu0 %1760
        %v1763 = vsel %vm610, %v1759, 0
        %v1766 = vsel %vm610, %v1761, 0
        %1768 = vmatpush.bf16.xpose.msra.mxu0 0
        %1769 = vmatpush.bf16.xpose.msra.mxu0 0
        %1770 = vmatpush.bf16.xpose.msra.mxu0 0
        %1771 = vmatpush.bf16.xpose.msra.mxu0 0
        %1772 = vmatpush.bf16.xpose.msra.mxu0 0
        %1773 = vmatpush.bf16.xpose.msra.mxu0 0
        %1774 = vmatpush.bf16.xpose.msra.mxu0 0
        %1775 = vmatpush.bf16.xpose.msra.mxu0 %v1766
        %1776 = vmatmul.bf16.gmra.mxu0 %v1763
        %v1777 = vpop.f32.mrf.mxu0
        %v1778 = vadd.f32 0.0, %v1777
        %v1779 = vpop.f32.mrf.mxu0
        %v1780 = vadd.f32 0.0, %v1779
        %1781 = vdwg.mxu0
        %v1782 = vadd.f32 %v1706, %v704
        %v1783 = vadd.f32 %v1708, %v704
        %v1784 = vadd.f32 %v1730, %v704
        %v1785 = vadd.f32 %v1732, %v704
        %v1786 = vadd.f32 %v1754, %v704
        %v1787 = vadd.f32 %v1756, %v704
        %v1788 = vadd.f32 %v1778, %v704
        %v1789 = vadd.f32 %v1780, %v704
        %v1790 = vsel %vm714, %v1782, -inf
        %1791 = vmax.xlane.f32.xlu0 %v1790
        %v1792 = vpop.xlane.xlu0 %1791
        %v1793 = vsel %vm714, %v1783, -inf
        %1794 = vmax.xlane.f32.xlu0 %v1793
        %v1795 = vpop.xlane.xlu0 %1794
        %v1796 = vsel %vm714, %v1784, -inf
        %1797 = vmax.xlane.f32.xlu0 %v1796
        %v1798 = vpop.xlane.xlu0 %1797
        %v1799 = vsel %vm714, %v1785, -inf
        %1800 = vmax.xlane.f32.xlu0 %v1799
        %v1801 = vpop.xlane.xlu0 %1800
        %v1802 = vsel %vm714, %v1786, -inf
        %1803 = vmax.xlane.f32.xlu0 %v1802
        %v1804 = vpop.xlane.xlu0 %1803
        %v1805 = vsel %vm714, %v1787, -inf
        %1806 = vmax.xlane.f32.xlu0 %v1805
        %v1807 = vpop.xlane.xlu0 %1806
        %v1808 = vsel %vm714, %v1788, -inf
        %1809 = vmax.xlane.f32.xlu0 %v1808
        %v1810 = vpop.xlane.xlu0 %1809
        %v1811 = vsel %vm714, %v1789, -inf
        %1812 = vmax.xlane.f32.xlu0 %v1811
        %v1813 = vpop.xlane.xlu0 %1812
        %v1814 = vsub.f32 %v1782, %v1792
        %v1815 = vsub.f32 %v1783, %v1795
        %v1816 = vsub.f32 %v1784, %v1798
        %v1817 = vsub.f32 %v1785, %v1801
        %v1818 = vsub.f32 %v1786, %v1804
        %v1819 = vsub.f32 %v1787, %v1807
        %v1820 = vsub.f32 %v1788, %v1810
        %v1821 = vsub.f32 %v1789, %v1813
        %v1822 = vmul.f32 %v1814, 1.442695
        %v1823 = vpow.pop %v1822
        %v1824 = vmul.f32 %v1815, 1.442695
        %v1825 = vpow.pop %v1824
        %v1826 = vmul.f32 %v1816, 1.442695
        %v1827 = vpow.pop %v1826
        %v1828 = vmul.f32 %v1817, 1.442695
        %v1829 = vpow.pop %v1828
        %v1830 = vmul.f32 %v1818, 1.442695
        %v1831 = vpow.pop %v1830
        %v1832 = vmul.f32 %v1819, 1.442695
        %v1833 = vpow.pop %v1832
        %v1834 = vmul.f32 %v1820, 1.442695
        %v1835 = vpow.pop %v1834
        %v1836 = vmul.f32 %v1821, 1.442695
        %v1837 = vpow.pop %v1836
        %v1838 = vsel %vm714, %v1823, 0.0
        %1839 = vadd.xlane.f32.xlu0 %v1838
        %v1840 = vpop.xlane.xlu0 %1839
        %v1841 = vsel %vm714, %v1825, 0.0
        %1842 = vadd.xlane.f32.xlu0 %v1841
        %v1843 = vpop.xlane.xlu0 %1842
        %v1844 = vsel %vm714, %v1827, 0.0
        %1845 = vadd.xlane.f32.xlu0 %v1844
        %v1846 = vpop.xlane.xlu0 %1845
        %v1847 = vsel %vm714, %v1829, 0.0
        %1848 = vadd.xlane.f32.xlu0 %v1847
        %v1849 = vpop.xlane.xlu0 %1848
        %v1850 = vsel %vm714, %v1831, 0.0
        %1851 = vadd.xlane.f32.xlu0 %v1850
        %v1852 = vpop.xlane.xlu0 %1851
        %v1853 = vsel %vm714, %v1833, 0.0
        %1854 = vadd.xlane.f32.xlu0 %v1853
        %v1855 = vpop.xlane.xlu0 %1854
        %v1856 = vsel %vm714, %v1835, 0.0
        %1857 = vadd.xlane.f32.xlu0 %v1856
        %v1858 = vpop.xlane.xlu0 %1857
        %v1859 = vsel %vm714, %v1837, 0.0
        %1860 = vadd.xlane.f32.xlu0 %v1859
        %v1861 = vpop.xlane.xlu0 %1860
        %v1862 = vrcp.pop %v1840
        %v1863 = vrcp.pop %v1843
        %v1864 = vrcp.pop %v1846
        %v1865 = vrcp.pop %v1849
        %v1866 = vrcp.pop %v1852
        %v1867 = vrcp.pop %v1855
        %v1868 = vrcp.pop %v1858
        %v1869 = vrcp.pop %v1861
        %v1870 = vmul.f32 %v1823, %v1862
        %v1871 = vmul.f32 %v1825, %v1863
        %v1872 = vmul.f32 %v1827, %v1864
        %v1873 = vmul.f32 %v1829, %v1865
        %v1874 = vmul.f32 %v1831, %v1866
        %v1875 = vmul.f32 %v1833, %v1867
        %v1876 = vmul.f32 %v1835, %v1868
        %v1877 = vmul.f32 %v1837, %v1869
        %v1878 = vpack.c.bf16 %v1870, %v1870
        %v1879 = vpack.c.bf16 %v1871, %v1871
        %v1880 = vpack.c.bf16 %v1872, %v1872
        %v1881 = vpack.c.bf16 %v1873, %v1873
        %v1882 = vpack.c.bf16 %v1874, %v1874
        %v1883 = vpack.c.bf16 %v1875, %v1875
        %v1884 = vpack.c.bf16 %v1876, %v1876
        %v1885 = vpack.c.bf16 %v1877, %v1877
        %v1888 = vunpack.c.l.b16 %v1878
        %v1889 = vunpack.c.l.b16 %v1879
        %v1890 = vpack.c.b16 %v1889, %v1888
        %v1893 = vunpack.c.l.b16 %v1678
        %v1894 = vunpack.c.l.b16 %v1679
        %v1895 = vpack.c.b16 %v1894, %v1893
        %v1898 = vsel %vm714, %v1890, 0
        %1900 = vmatpush.bf16.msra.mxu0 0
        %1901 = vmatpush.bf16.msra.mxu0 0
        %1902 = vmatpush.bf16.msra.mxu0 0
        %1903 = vmatpush.bf16.msra.mxu0 0
        %1904 = vmatpush.bf16.msra.mxu0 0
        %1905 = vmatpush.bf16.msra.mxu0 0
        %1906 = vmatpush.bf16.msra.mxu0 0
        %1907 = vmatpush.bf16.msra.mxu0 %v1895
        %1908 = vmatmul.bf16.gmra.mxu0 %v1898
        %v1909 = vpop.f32.mrf.mxu0
        %v1910 = vadd.f32 0.0, %v1909
        %v1911 = vpop.f32.mrf.mxu0
        %v1912 = vadd.f32 0.0, %v1911
        %1913 = vdwg.mxu0
        %v1916 = vunpack.c.l.b16 %v1880
        %v1917 = vunpack.c.l.b16 %v1881
        %v1918 = vpack.c.b16 %v1917, %v1916
        %1919 = vrot.lane.b32.xlu0 %v1895, 96
        %v1920 = vpop.permute.xlu0 %1919
        %v1923 = vsel %vm714, %v1918, 0
        %1925 = vmatpush.bf16.msra.mxu0 0
        %1926 = vmatpush.bf16.msra.mxu0 0
        %1927 = vmatpush.bf16.msra.mxu0 0
        %1928 = vmatpush.bf16.msra.mxu0 0
        %1929 = vmatpush.bf16.msra.mxu0 0
        %1930 = vmatpush.bf16.msra.mxu0 0
        %1931 = vmatpush.bf16.msra.mxu0 0
        %1932 = vmatpush.bf16.msra.mxu0 %v1920
        %1933 = vmatmul.bf16.gmra.mxu0 %v1923
        %v1934 = vpop.f32.mrf.mxu0
        %v1935 = vadd.f32 0.0, %v1934
        %v1936 = vpop.f32.mrf.mxu0
        %v1937 = vadd.f32 0.0, %v1936
        %1938 = vdwg.mxu0
        %v1941 = vunpack.c.l.b16 %v1882
        %v1942 = vunpack.c.l.b16 %v1883
        %v1943 = vpack.c.b16 %v1942, %v1941
        %1944 = vrot.lane.b32.xlu0 %v1895, 64
        %v1945 = vpop.permute.xlu0 %1944
        %v1948 = vsel %vm714, %v1943, 0
        %1950 = vmatpush.bf16.msra.mxu0 0
        %1951 = vmatpush.bf16.msra.mxu0 0
        %1952 = vmatpush.bf16.msra.mxu0 0
        %1953 = vmatpush.bf16.msra.mxu0 0
        %1954 = vmatpush.bf16.msra.mxu0 0
        %1955 = vmatpush.bf16.msra.mxu0 0
        %1956 = vmatpush.bf16.msra.mxu0 0
        %1957 = vmatpush.bf16.msra.mxu0 %v1945
        %1958 = vmatmul.bf16.gmra.mxu0 %v1948
        %v1959 = vpop.f32.mrf.mxu0
        %v1960 = vadd.f32 0.0, %v1959
        %v1961 = vpop.f32.mrf.mxu0
        %v1962 = vadd.f32 0.0, %v1961
        %1963 = vdwg.mxu0
        %v1966 = vunpack.c.l.b16 %v1884
        %v1967 = vunpack.c.l.b16 %v1885
        %v1968 = vpack.c.b16 %v1967, %v1966
        %1969 = vrot.lane.b32.xlu0 %v1895, 32
        %v1970 = vpop.permute.xlu0 %1969
        %v1973 = vsel %vm714, %v1968, 0
        %1975 = vmatpush.bf16.msra.mxu0 0
        %1976 = vmatpush.bf16.msra.mxu0 0
        %1977 = vmatpush.bf16.msra.mxu0 0
        %1978 = vmatpush.bf16.msra.mxu0 0
        %1979 = vmatpush.bf16.msra.mxu0 0
        %1980 = vmatpush.bf16.msra.mxu0 0
        %1981 = vmatpush.bf16.msra.mxu0 0
        %1982 = vmatpush.bf16.msra.mxu0 %v1970
        %1983 = vmatmul.bf16.gmra.mxu0 %v1973
        %v1984 = vpop.f32.mrf.mxu0
        %v1985 = vadd.f32 0.0, %v1984
        %v1986 = vpop.f32.mrf.mxu0
        %v1987 = vadd.f32 0.0, %v1986
        %1988 = vdwg.mxu0
        %1991 = vrot.lane.b32.xlu0 %v1935, 32
        %v1992 = vpop.permute.xlu0 %1991
        %1993 = vrot.lane.b32.xlu0 %v1937, 32
        %v1994 = vpop.permute.xlu0 %1993
        %1999 = vrot.lane.b32.xlu0 %v1960, 64
        %v2000 = vpop.permute.xlu0 %1999
        %2001 = vrot.lane.b32.xlu0 %v1962, 64
        %v2002 = vpop.permute.xlu0 %2001
        %2007 = vrot.lane.b32.xlu0 %v1985, 96
        %v2008 = vpop.permute.xlu0 %2007
        %2009 = vrot.lane.b32.xlu0 %v1987, 96
        %v2010 = vpop.permute.xlu0 %2009
        %v2013 = vsel %vm610, %v1910, %v1992
        %v2014 = vsel %vm610, %v1912, %v1994
        %v2015 = vsel %vm940, %v2013, %v2000
        %v2016 = vsel %vm940, %v2014, %v2002
        %v2017 = vsel %vm943, %v2015, %v2008
        %v2018 = vsel %vm943, %v2016, %v2010
        %v2019 = vpack.c.bf16 %v2018, %v2017
        %s2020 = scalar_lea.vmem [#allocation2], 64
        %v2021 = vld [vmem:[%s2020] sm:$0xf]
        %v2022 = vld [vmem:[%s2020 + $0x4] sm:$0xf]
        %v2023 = vld [vmem:[%s2020 + $0x8] sm:$0xf]
        %v2024 = vld [vmem:[%s2020 + $0xc] sm:$0xf]
        %v2025 = vld [vmem:[%s2020 + $0x10] sm:$0xf]
        %v2026 = vld [vmem:[%s2020 + $0x14] sm:$0xf]
        %v2027 = vld [vmem:[%s2020 + $0x18] sm:$0xf]
        %v2028 = vld [vmem:[%s2020 + $0x1c] sm:$0xf]
        %v2029 = vld [vmem:[%s2020 + $0x20] sm:$0xf]
        %v2030 = vld [vmem:[%s2020 + $0x24] sm:$0xf]
        %v2031 = vld [vmem:[%s2020 + $0x28] sm:$0xf]
        %v2032 = vld [vmem:[%s2020 + $0x2c] sm:$0xf]
        %v2033 = vld [vmem:[%s2020 + $0x30] sm:$0xf]
        %v2034 = vld [vmem:[%s2020 + $0x34] sm:$0xf]
        %v2035 = vld [vmem:[%s2020 + $0x38] sm:$0xf]
        %v2036 = vld [vmem:[%s2020 + $0x3c] sm:$0xf]
        %s2037 = scalar_lea.vmem %s5, 8
        %v2038 = vld [vmem:[%s2037] sm:$0x1]
        %v2039 = vperm.slane %v2038, 0
        %v2056 = vunpack.c.l.b16 %v2021
        %v2057 = vunpack.c.l.b16 %v2022
        %v2058 = vunpack.c.l.b16 %v2023
        %v2059 = vunpack.c.l.b16 %v2024
        %v2060 = vunpack.c.l.b16 %v2025
        %v2061 = vunpack.c.l.b16 %v2026
        %v2062 = vunpack.c.l.b16 %v2027
        %v2063 = vunpack.c.l.b16 %v2028
        %v2064 = vunpack.c.l.b16 %v2029
        %v2065 = vunpack.c.l.b16 %v2030
        %v2066 = vunpack.c.l.b16 %v2031
        %v2067 = vunpack.c.l.b16 %v2032
        %v2068 = vunpack.c.l.b16 %v2033
        %v2069 = vunpack.c.l.b16 %v2034
        %v2070 = vunpack.c.l.b16 %v2035
        %v2071 = vunpack.c.l.b16 %v2036
        %v2072 = vpack.c.b16 %v2057, %v2056
        %v2073 = vpack.c.b16 %v2059, %v2058
        %v2074 = vpack.c.b16 %v2061, %v2060
        %v2075 = vpack.c.b16 %v2063, %v2062
        %v2076 = vpack.c.b16 %v2065, %v2064
        %v2077 = vpack.c.b16 %v2067, %v2066
        %v2078 = vpack.c.b16 %v2069, %v2068
        %v2079 = vpack.c.b16 %v2071, %v2070
        %2088 = vmatpush.bf16.msra.mxu0 %v2079
        %2089 = vmatpush.bf16.msra.mxu0 %v2078
        %2090 = vmatpush.bf16.msra.mxu0 %v2077
        %2091 = vmatpush.bf16.msra.mxu0 %v2076
        %2092 = vmatpush.bf16.msra.mxu0 %v2075
        %2093 = vmatpush.bf16.msra.mxu0 %v2074
        %2094 = vmatpush.bf16.msra.mxu0 %v2073
        %2095 = vmatpush.bf16.msra.mxu0 %v2072
        %2096 = vmatmul.bf16.gmra.mxu0 %v2019
        %v2097 = vpop.f32.mrf.mxu0
        %v2098 = vadd.f32 %v2039, %v2097
        %v2099 = vpop.f32.mrf.mxu0
        %v2100 = vadd.f32 %v2039, %v2099
        %2101 = vdwg.mxu0
        %v2102 = vadd.f32 %v1459, %v2098
        %v2103 = vadd.f32 %v1460, %v2100
        %v2104 = vld [vmem:[%s2037 + $0x1] sm:$0x1]
        %v2105 = vld [vmem:[%s2037 + $0x2] sm:$0x1]
        %2106 = vadd.xlane.f32.xlu0 %v2102
        %v2107 = vpop.xlane.xlu0 %2106
        %2108 = vadd.xlane.f32.xlu0 %v2103
        %v2109 = vpop.xlane.xlu0 %2108
        %v2110 = vmul.f32 %v2107, %v1041
        %v2111 = vmul.f32 %v2109, %v1041
        %v2112 = vsub.f32 %v2102, %v2110
        %v2113 = vsub.f32 %v2103, %v2111
        %v2114 = vmul.f32 %v2112, %v2112
        %v2115 = vmul.f32 %v2113, %v2113
        %2116 = vadd.xlane.f32.xlu0 %v2114
        %v2117 = vpop.xlane.xlu0 %2116
        %2118 = vadd.xlane.f32.xlu0 %v2115
        %v2119 = vpop.xlane.xlu0 %2118
        %v2120 = vmul.f32 %v2117, %v1041
        %v2121 = vmul.f32 %v2119, %v1041
        %v2122 = vadd.f32 %v2120, 1e-05
        %v2123 = vadd.f32 %v2121, 1e-05
        %v2124 = vrsqrt.pop %v2122
        %v2125 = vmul.f32 %v2124, %v2122
        %v2126 = vmul.f32 %v2125, %v2124
        %v2127 = vmul.f32 0.5, %v2126
        %v2128 = vsub.f32 1.5, %v2127
        %v2129 = vmul.f32 %v2124, %v2128
        %vm2130 = vweird.f32 %v2122
        %vm2131 = vweird.f32 %v2124
        %vm2132 = vmor %vm2130, %vm2131
        %v2133 = vsel %vm2132, %v2124, %v2129
        %v2134 = vrsqrt.pop %v2123
        %v2135 = vmul.f32 %v2134, %v2123
        %v2136 = vmul.f32 %v2135, %v2134
        %v2137 = vmul.f32 0.5, %v2136
        %v2138 = vsub.f32 1.5, %v2137
        %v2139 = vmul.f32 %v2134, %v2138
        %vm2140 = vweird.f32 %v2123
        %vm2141 = vweird.f32 %v2134
        %vm2142 = vmor %vm2140, %vm2141
        %v2143 = vsel %vm2142, %v2134, %v2139
        %v2144 = vmul.f32 %v2112, %v2133
        %v2145 = vmul.f32 %v2113, %v2143
        %v2146 = vperm.slane %v2104, 0
        %v2147 = vmul.f32 %v2144, %v2146
        %v2148 = vmul.f32 %v2145, %v2146
        %v2149 = vperm.slane %v2105, 0
        %v2150 = vadd.f32 %v2147, %v2149
        %v2151 = vadd.f32 %v2148, %v2149
        %v2152 = vpack.c.bf16 %v2151, %v2150
        %s2153 = scalar_lea.vmem %s6, 128
        %v2154 = vld [vmem:[%s2153] sm:$0xff]
        %v2155 = vld [vmem:[%s2153 + $0x8] sm:$0xff]
        %v2156 = vld [vmem:[%s2153 + $0x10] sm:$0xff]
        %v2157 = vld [vmem:[%s2153 + $0x18] sm:$0xff]
        %v2158 = vld [vmem:[%s2153 + $0x20] sm:$0xff]
        %v2159 = vld [vmem:[%s2153 + $0x28] sm:$0xff]
        %v2160 = vld [vmem:[%s2153 + $0x30] sm:$0xff]
        %v2161 = vld [vmem:[%s2153 + $0x38] sm:$0xff]
        %v2162 = vld [vmem:[%s2153 + $0x40] sm:$0xff]
        %v2163 = vld [vmem:[%s2153 + $0x48] sm:$0xff]
        %v2164 = vld [vmem:[%s2153 + $0x50] sm:$0xff]
        %v2165 = vld [vmem:[%s2153 + $0x58] sm:$0xff]
        %v2166 = vld [vmem:[%s2153 + $0x60] sm:$0xff]
        %v2167 = vld [vmem:[%s2153 + $0x68] sm:$0xff]
        %v2168 = vld [vmem:[%s2153 + $0x70] sm:$0xff]
        %v2169 = vld [vmem:[%s2153 + $0x78] sm:$0xff]
        %s2170 = scalar_lea.vmem %s7, 2
        %v2171 = vld [vmem:[%s2170] sm:$0x3]
        %v2173 = vperm.slane %v2171, 0
        %v2174 = vperm.slane %v2171, 1
        %v2193 = vunpack.c.l.b16 %v2154
        %v2194 = vunpack.c.h.b16 %v2154
        %v2195 = vunpack.c.l.b16 %v2155
        %v2196 = vunpack.c.h.b16 %v2155
        %v2197 = vunpack.c.l.b16 %v2156
        %v2198 = vunpack.c.h.b16 %v2156
        %v2199 = vunpack.c.l.b16 %v2157
        %v2200 = vunpack.c.h.b16 %v2157
        %v2201 = vunpack.c.l.b16 %v2158
        %v2202 = vunpack.c.h.b16 %v2158
        %v2203 = vunpack.c.l.b16 %v2159
        %v2204 = vunpack.c.h.b16 %v2159
        %v2205 = vunpack.c.l.b16 %v2160
        %v2206 = vunpack.c.h.b16 %v2160
        %v2207 = vunpack.c.l.b16 %v2161
        %v2208 = vunpack.c.h.b16 %v2161
        %v2209 = vunpack.c.l.b16 %v2162
        %v2210 = vunpack.c.h.b16 %v2162
        %v2211 = vunpack.c.l.b16 %v2163
        %v2212 = vunpack.c.h.b16 %v2163
        %v2213 = vunpack.c.l.b16 %v2164
        %v2214 = vunpack.c.h.b16 %v2164
        %v2215 = vunpack.c.l.b16 %v2165
        %v2216 = vunpack.c.h.b16 %v2165
        %v2217 = vunpack.c.l.b16 %v2166
        %v2218 = vunpack.c.h.b16 %v2166
        %v2219 = vunpack.c.l.b16 %v2167
        %v2220 = vunpack.c.h.b16 %v2167
        %v2221 = vunpack.c.l.b16 %v2168
        %v2222 = vunpack.c.h.b16 %v2168
        %v2223 = vunpack.c.l.b16 %v2169
        %v2224 = vunpack.c.h.b16 %v2169
        %v2225 = vpack.c.b16 %v2195, %v2193
        %v2226 = vpack.c.b16 %v2196, %v2194
        %v2227 = vpack.c.b16 %v2199, %v2197
        %v2228 = vpack.c.b16 %v2200, %v2198
        %v2229 = vpack.c.b16 %v2203, %v2201
        %v2230 = vpack.c.b16 %v2204, %v2202
        %v2231 = vpack.c.b16 %v2207, %v2205
        %v2232 = vpack.c.b16 %v2208, %v2206
        %v2233 = vpack.c.b16 %v2211, %v2209
        %v2234 = vpack.c.b16 %v2212, %v2210
        %v2235 = vpack.c.b16 %v2215, %v2213
        %v2236 = vpack.c.b16 %v2216, %v2214
        %v2237 = vpack.c.b16 %v2219, %v2217
        %v2238 = vpack.c.b16 %v2220, %v2218
        %v2239 = vpack.c.b16 %v2223, %v2221
        %v2240 = vpack.c.b16 %v2224, %v2222
        %2257 = vmatpush.bf16.msra.mxu0 %v2239
        %2258 = vmatpush.bf16.msra.mxu0 %v2237
        %2259 = vmatpush.bf16.msra.mxu0 %v2235
        %2260 = vmatpush.bf16.msra.mxu0 %v2233
        %2261 = vmatpush.bf16.msra.mxu0 %v2231
        %2262 = vmatpush.bf16.msra.mxu0 %v2229
        %2263 = vmatpush.bf16.msra.mxu0 %v2227
        %2264 = vmatpush.bf16.msra.mxu0 %v2225
        %2265 = vmatmul.bf16.gmra.mxu0 %v2152
        %v2266 = vpop.f32.mrf.mxu0
        %v2267 = vadd.f32 %v2173, %v2266
        %v2268 = vpop.f32.mrf.mxu0
        %v2269 = vadd.f32 %v2173, %v2268
        %2270 = vdwg.mxu0
        %2271 = vmatpush.bf16.msra.mxu0 %v2240
        %2272 = vmatpush.bf16.msra.mxu0 %v2238
        %2273 = vmatpush.bf16.msra.mxu0 %v2236
        %2274 = vmatpush.bf16.msra.mxu0 %v2234
        %2275 = vmatpush.bf16.msra.mxu0 %v2232
        %2276 = vmatpush.bf16.msra.mxu0 %v2230
        %2277 = vmatpush.bf16.msra.mxu0 %v2228
        %2278 = vmatpush.bf16.msra.mxu0 %v2226
        %2279 = vmatmul.bf16.gmra.mxu0 %v2152
        %v2280 = vpop.f32.mrf.mxu0
        %v2281 = vadd.f32 %v2174, %v2280
        %v2282 = vpop.f32.mrf.mxu0
        %v2283 = vadd.f32 %v2174, %v2282
        %2284 = vdwg.mxu0
        %v2285 = vmul.f32 %v2267, 0.5
        %v2286 = vmul.f32 %v2281, 0.5
        %v2287 = vmul.f32 %v2269, 0.5
        %v2288 = vmul.f32 %v2283, 0.5
        %v2289 = vmul.f32 %v2267, 0.044715
        %v2290 = vmul.f32 %v2281, 0.044715
        %v2291 = vmul.f32 %v2269, 0.044715
        %v2292 = vmul.f32 %v2283, 0.044715
        %v2293 = vmul.f32 %v2289, %v2267
        %v2294 = vmul.f32 %v2290, %v2281
        %v2295 = vmul.f32 %v2291, %v2269
        %v2296 = vmul.f32 %v2292, %v2283
        %v2297 = vmul.f32 %v2293, %v2267
        %v2298 = vmul.f32 %v2294, %v2281
        %v2299 = vmul.f32 %v2295, %v2269
        %v2300 = vmul.f32 %v2296, %v2283
        %v2301 = vadd.f32 %v2267, %v2297
        %v2302 = vadd.f32 %v2281, %v2298
        %v2303 = vadd.f32 %v2269, %v2299
        %v2304 = vadd.f32 %v2283, %v2300
        %v2305 = vmul.f32 %v2301, 0.7978846
        %v2306 = vmul.f32 %v2302, 0.7978846
        %v2307 = vmul.f32 %v2303, 0.7978846
        %v2308 = vmul.f32 %v2304, 0.7978846
        %v2309 = vtanh.pop %v2305
        %v2310 = vtanh.pop %v2306
        %v2311 = vtanh.pop %v2307
        %v2312 = vtanh.pop %v2308
        %v2313 = vadd.f32 %v2309, 1.0
        %v2314 = vadd.f32 %v2310, 1.0
        %v2315 = vadd.f32 %v2311, 1.0
        %v2316 = vadd.f32 %v2312, 1.0
        %v2317 = vmul.f32 %v2285, %v2313
        %v2318 = vmul.f32 %v2286, %v2314
        %v2319 = vmul.f32 %v2287, %v2315
        %v2320 = vmul.f32 %v2288, %v2316
        %v2321 = vpack.c.bf16 %v2319, %v2317
        %v2322 = vpack.c.bf16 %v2320, %v2318
        %s2323 = scalar_lea.vmem [#allocation5], 128
        %v2324 = vld [vmem:[%s2323] sm:$0xf]
        %v2325 = vld [vmem:[%s2323 + $0x4] sm:$0xf]
        %v2326 = vld [vmem:[%s2323 + $0x8] sm:$0xf]
        %v2327 = vld [vmem:[%s2323 + $0xc] sm:$0xf]
        %v2328 = vld [vmem:[%s2323 + $0x10] sm:$0xf]
        %v2329 = vld [vmem:[%s2323 + $0x14] sm:$0xf]
        %v2330 = vld [vmem:[%s2323 + $0x18] sm:$0xf]
        %v2331 = vld [vmem:[%s2323 + $0x1c] sm:$0xf]
        %v2332 = vld [vmem:[%s2323 + $0x20] sm:$0xf]
        %v2333 = vld [vmem:[%s2323 + $0x24] sm:$0xf]
        %v2334 = vld [vmem:[%s2323 + $0x28] sm:$0xf]
        %v2335 = vld [vmem:[%s2323 + $0x2c] sm:$0xf]
        %v2336 = vld [vmem:[%s2323 + $0x30] sm:$0xf]
        %v2337 = vld [vmem:[%s2323 + $0x34] sm:$0xf]
        %v2338 = vld [vmem:[%s2323 + $0x38] sm:$0xf]
        %v2339 = vld [vmem:[%s2323 + $0x3c] sm:$0xf]
        %v2340 = vld [vmem:[%s2323 + $0x40] sm:$0xf]
        %v2341 = vld [vmem:[%s2323 + $0x44] sm:$0xf]
        %v2342 = vld [vmem:[%s2323 + $0x48] sm:$0xf]
        %v2343 = vld [vmem:[%s2323 + $0x4c] sm:$0xf]
        %v2344 = vld [vmem:[%s2323 + $0x50] sm:$0xf]
        %v2345 = vld [vmem:[%s2323 + $0x54] sm:$0xf]
        %v2346 = vld [vmem:[%s2323 + $0x58] sm:$0xf]
        %v2347 = vld [vmem:[%s2323 + $0x5c] sm:$0xf]
        %v2348 = vld [vmem:[%s2323 + $0x60] sm:$0xf]
        %v2349 = vld [vmem:[%s2323 + $0x64] sm:$0xf]
        %v2350 = vld [vmem:[%s2323 + $0x68] sm:$0xf]
        %v2351 = vld [vmem:[%s2323 + $0x6c] sm:$0xf]
        %v2352 = vld [vmem:[%s2323 + $0x70] sm:$0xf]
        %v2353 = vld [vmem:[%s2323 + $0x74] sm:$0xf]
        %v2354 = vld [vmem:[%s2323 + $0x78] sm:$0xf]
        %v2355 = vld [vmem:[%s2323 + $0x7c] sm:$0xf]
        %v2356 = vld [vmem:[%s2037 + $0x3] sm:$0x1]
        %v2357 = vperm.slane %v2356, 0
        %v2390 = vunpack.c.l.b16 %v2324
        %v2391 = vunpack.c.l.b16 %v2325
        %v2392 = vunpack.c.l.b16 %v2326
        %v2393 = vunpack.c.l.b16 %v2327
        %v2394 = vunpack.c.l.b16 %v2328
        %v2395 = vunpack.c.l.b16 %v2329
        %v2396 = vunpack.c.l.b16 %v2330
        %v2397 = vunpack.c.l.b16 %v2331
        %v2398 = vunpack.c.l.b16 %v2332
        %v2399 = vunpack.c.l.b16 %v2333
        %v2400 = vunpack.c.l.b16 %v2334
        %v2401 = vunpack.c.l.b16 %v2335
        %v2402 = vunpack.c.l.b16 %v2336
        %v2403 = vunpack.c.l.b16 %v2337
        %v2404 = vunpack.c.l.b16 %v2338
        %v2405 = vunpack.c.l.b16 %v2339
        %v2406 = vunpack.c.l.b16 %v2340
        %v2407 = vunpack.c.l.b16 %v2341
        %v2408 = vunpack.c.l.b16 %v2342
        %v2409 = vunpack.c.l.b16 %v2343
        %v2410 = vunpack.c.l.b16 %v2344
        %v2411 = vunpack.c.l.b16 %v2345
        %v2412 = vunpack.c.l.b16 %v2346
        %v2413 = vunpack.c.l.b16 %v2347
        %v2414 = vunpack.c.l.b16 %v2348
        %v2415 = vunpack.c.l.b16 %v2349
        %v2416 = vunpack.c.l.b16 %v2350
        %v2417 = vunpack.c.l.b16 %v2351
        %v2418 = vunpack.c.l.b16 %v2352
        %v2419 = vunpack.c.l.b16 %v2353
        %v2420 = vunpack.c.l.b16 %v2354
        %v2421 = vunpack.c.l.b16 %v2355
        %v2422 = vpack.c.b16 %v2391, %v2390
        %v2423 = vpack.c.b16 %v2393, %v2392
        %v2424 = vpack.c.b16 %v2395, %v2394
        %v2425 = vpack.c.b16 %v2397, %v2396
        %v2426 = vpack.c.b16 %v2399, %v2398
        %v2427 = vpack.c.b16 %v2401, %v2400
        %v2428 = vpack.c.b16 %v2403, %v2402
        %v2429 = vpack.c.b16 %v2405, %v2404
        %v2430 = vpack.c.b16 %v2407, %v2406
        %v2431 = vpack.c.b16 %v2409, %v2408
        %v2432 = vpack.c.b16 %v2411, %v2410
        %v2433 = vpack.c.b16 %v2413, %v2412
        %v2434 = vpack.c.b16 %v2415, %v2414
        %v2435 = vpack.c.b16 %v2417, %v2416
        %v2436 = vpack.c.b16 %v2419, %v2418
        %v2437 = vpack.c.b16 %v2421, %v2420
        %2454 = vmatpush.bf16.msra.mxu0 %v2429
        %2455 = vmatpush.bf16.msra.mxu0 %v2428
        %2456 = vmatpush.bf16.msra.mxu0 %v2427
        %2457 = vmatpush.bf16.msra.mxu0 %v2426
        %2458 = vmatpush.bf16.msra.mxu0 %v2425
        %2459 = vmatpush.bf16.msra.mxu0 %v2424
        %2460 = vmatpush.bf16.msra.mxu0 %v2423
        %2461 = vmatpush.bf16.msra.mxu0 %v2422
        %2462 = vmatmul.bf16.gmra.mxu0 %v2321
        %v2463 = vpop.f32.mrf.mxu0
        %v2464 = vadd.f32 %v2357, %v2463
        %v2465 = vpop.f32.mrf.mxu0
        %v2466 = vadd.f32 %v2357, %v2465
        %2467 = vdwg.mxu0
        %2468 = vmatpush.bf16.msra.mxu0 %v2437
        %2469 = vmatpush.bf16.msra.mxu0 %v2436
        %2470 = vmatpush.bf16.msra.mxu0 %v2435
        %2471 = vmatpush.bf16.msra.mxu0 %v2434
        %2472 = vmatpush.bf16.msra.mxu0 %v2433
        %2473 = vmatpush.bf16.msra.mxu0 %v2432
        %2474 = vmatpush.bf16.msra.mxu0 %v2431
        %2475 = vmatpush.bf16.msra.mxu0 %v2430
        %2476 = vmatmul.bf16.gmra.mxu0 %v2322
        %v2477 = vpop.f32.mrf.mxu0
        %v2478 = vadd.f32 %v2464, %v2477
        %v2479 = vpop.f32.mrf.mxu0
        %v2480 = vadd.f32 %v2466, %v2479
        %2481 = vdwg.mxu0
        %v2482 = vadd.f32 %v2150, %v2478
        %v2483 = vadd.f32 %v2151, %v2480
        %v2484 = vld [vmem:[%s2037 + $0x4] sm:$0x1]
        %v2485 = vld [vmem:[%s2037 + $0x5] sm:$0x1]
        %2486 = vadd.xlane.f32.xlu0 %v2482
        %v2487 = vpop.xlane.xlu0 %2486
        %2488 = vadd.xlane.f32.xlu0 %v2483
        %v2489 = vpop.xlane.xlu0 %2488
        %v2490 = vmul.f32 %v2487, %v1041
        %v2491 = vmul.f32 %v2489, %v1041
        %v2492 = vsub.f32 %v2482, %v2490
        %v2493 = vsub.f32 %v2483, %v2491
        %v2494 = vmul.f32 %v2492, %v2492
        %v2495 = vmul.f32 %v2493, %v2493
        %2496 = vadd.xlane.f32.xlu0 %v2494
        %v2497 = vpop.xlane.xlu0 %2496
        %2498 = vadd.xlane.f32.xlu0 %v2495
        %v2499 = vpop.xlane.xlu0 %2498
        %v2500 = vmul.f32 %v2497, %v1041
        %v2501 = vmul.f32 %v2499, %v1041
        %v2502 = vadd.f32 %v2500, 1e-05
        %v2503 = vadd.f32 %v2501, 1e-05
        %v2504 = vrsqrt.pop %v2502
        %v2505 = vmul.f32 %v2504, %v2502
        %v2506 = vmul.f32 %v2505, %v2504
        %v2507 = vmul.f32 0.5, %v2506
        %v2508 = vsub.f32 1.5, %v2507
        %v2509 = vmul.f32 %v2504, %v2508
        %vm2510 = vweird.f32 %v2502
        %vm2511 = vweird.f32 %v2504
        %vm2512 = vmor %vm2510, %vm2511
        %v2513 = vsel %vm2512, %v2504, %v2509
        %v2514 = vrsqrt.pop %v2503
        %v2515 = vmul.f32 %v2514, %v2503
        %v2516 = vmul.f32 %v2515, %v2514
        %v2517 = vmul.f32 0.5, %v2516
        %v2518 = vsub.f32 1.5, %v2517
        %v2519 = vmul.f32 %v2514, %v2518
        %vm2520 = vweird.f32 %v2503
        %vm2521 = vweird.f32 %v2514
        %vm2522 = vmor %vm2520, %vm2521
        %v2523 = vsel %vm2522, %v2514, %v2519
        %v2524 = vmul.f32 %v2492, %v2513
        %v2525 = vmul.f32 %v2493, %v2523
        %v2526 = vperm.slane %v2484, 0
        %v2527 = vmul.f32 %v2524, %v2526
        %v2528 = vmul.f32 %v2525, %v2526
        %v2529 = vperm.slane %v2485, 0
        %v2530 = vadd.f32 %v2527, %v2529
        %v2531 = vadd.f32 %v2528, %v2529
        %2532 = vst [vmem:[%s370] sm:$0xff] %v2530
        %2533 = vst [vmem:[%s370 + $0x8] sm:$0xff] %v2531
        %s2534 = sand.u32 %s232, 1
        %s2535 = scalar_lea.sflag [#allocation4], %s2534
        %s2536 = sand.u32 %s232, 1
        %s2537 = smul.addr %s2536, 16
        %s2538 = scalar_lea.vmem [#allocation7], %s2537
        // Predicated region
        $region65: #{roberta_base_layer_forward.1} parent=55 // pred_check
          %p2539 = pneg %p242
        $region66: #{roberta_base_layer_forward.1} parent=55 // pred_check_branch
          %2541 = sbr.rel (%p2539) target = $region68
        $region67: #{roberta_base_layer_forward.1} parent=55 // pred_region
          %2543 = vsyncadd %s2535, 0
          %s2544 = smul.addr %s25, 2
          %s2545 = smul.addr %s2544, 8
          %s2546 = scalar_lea.hbm %s9, %s2545
          %s2547 = sshll.u32 %s2538, 4
          %s2548 = int_to_ptr.vmem [resolvable:$true] %s2547
          %s2549 = sshll.u32 %s2546, 4
          %s2550 = int_to_ptr.hbm [resolvable:$true] %s2549
          %2555 = dma.vmem_to_hbm [thread:$0]  %s2548, 256, %s2550, %s2535, 128, 128, 8
        $region68: #{roberta_base_layer_forward.1} parent=55 // pred_fallthru
          _
      $region56: #{roberta_base_layer_forward.1} parent=5 // pred_fallthru
        _
      %p2556 = scmp.le.s32.totalorder 2, %s20
      // Predicated region
      $region69: #{roberta_base_layer_forward.1} parent=5 // pred_check
        %p2557 = pneg %p2556
      $region70: #{roberta_base_layer_forward.1} parent=5 // pred_check_branch
        %2559 = sbr.rel (%p2557) target = $region72
      $region71: #{roberta_base_layer_forward.1} parent=5 // pred_region
        %s2560 = ssub.s32 %s20, 2
        // Predicated region
        $region73: #{roberta_base_layer_forward.1} parent=71 // pred_check
          %p2561 = pneg %p248
        $region74: #{roberta_base_layer_forward.1} parent=71 // pred_check_branch
          %2563 = sbr.rel (%p2561) target = $region76
        $region75: #{roberta_base_layer_forward.1} parent=71 // pred_region
          %s2564 = sand.u32 %s233, 1
          %s2565 = scalar_lea.sflag [#allocation4], %s2564
          %s2566 = sand.u32 %s233, 1
          %s2567 = smul.addr %s2566, 16
          %s2568 = scalar_lea.vmem [#allocation7], %s2567
          %2570 = dma.done %s2565, 256
        $region76: #{roberta_base_layer_forward.1} parent=71 // pred_fallthru
          _
      $region72: #{roberta_base_layer_forward.1} parent=5 // pred_fallthru
        _
    $region6: #{roberta_base_layer_forward.1} parent=1 // loop_footer
      %s24 = sadd.s32 1, %s20
    $region7: #{roberta_base_layer_forward.1} parent=1 // loop_footer_branch
      %19 = sbr.rel target = $region3
    $region8: #{roberta_base_layer_forward.1} parent=1 // loop_exit
      _
    %2571 = vsyncpa [#allocation3], 1
    %s2572 = scalar_lea.sflag [#allocation3], 1
    %2573 = vsyncpa %s2572, 1
    %2574 = vsyncpa [#allocation6], 1
    %2575 = vsyncpa [#allocation4], 1
    %s2576 = scalar_lea.sflag [#allocation4], 1
    %2577 = vsyncpa %s2576, 1

</llo_original>
